<compile_context>
chip_gen: v5e
topology: v5e:2x2
jax: 0.10.0
libtpu: 0.0.40
codegen_flags: <defaults>
</compile_context>

<pallas_src>
import math

import jax
import jax.numpy as jnp
from jax.experimental import pallas as pl
from jax.experimental.pallas import tpu as pltpu

HID1 = 400   # torch hidden sizes
HID2 = 300
HP1 = 512    # lane-padded hidden sizes (multiples of 128); padding is exact
HP2 = 384


# --------------------------------------------------------------------------
# Kernel
# --------------------------------------------------------------------------
def _critic_kernel(state_ref, action_ref,
                   ws_ref, wa_ref, b14_ref,
                   w25_ref, b25_ref,
                   w36_ref, b36_ref,
                   q_ref):
    # ---- Layer 1: both towers fused along lanes.
    # x @ W14 computed as state @ W14[:S] + action @ W14[S:] (no concat op).
    s = state_ref[...].astype(jnp.bfloat16)
    a = action_ref[...].astype(jnp.bfloat16)
    h = (jnp.dot(s, ws_ref[...], preferred_element_type=jnp.float32)
         + jnp.dot(a, wa_ref[...], preferred_element_type=jnp.float32)
         + b14_ref[...])
    h = jnp.maximum(h, 0.0)                          # (TB, 2*HP1) f32

    # ---- Layer 2: two towers, one fused bias-add + ReLU over packed lanes.
    w25 = w25_ref[...]                               # (HP1, 2*HP2) bf16
    h1 = h[:, :HP1].astype(jnp.bfloat16)             # lane slice @ 512 (aligned)
    h2 = h[:, HP1:].astype(jnp.bfloat16)
    z1 = jnp.dot(h1, w25[:, :HP2], preferred_element_type=jnp.float32)
    z2 = jnp.dot(h2, w25[:, HP2:], preferred_element_type=jnp.float32)
    z = jnp.concatenate([z1, z2], axis=1) + b25_ref[...]   # (TB, 2*HP2)
    z = jnp.maximum(z, 0.0)

    # ---- Layer 3: block-diagonal (2*HP2, 2) weight -> single (TB, 2) output
    # holding [q1 | q2] lane-packed.
    q_ref[...] = (jnp.dot(z.astype(jnp.bfloat16), w36_ref[...],
                          preferred_element_type=jnp.float32)
                  + b36_ref[...])


# --------------------------------------------------------------------------
# Wrapper
# --------------------------------------------------------------------------
def critic_forward(state, action, prepared):
    """Pallas forward pass. Returns (q1, q2), each (B, 1) float32."""
    state = state.astype(jnp.float32)
    action = action.astype(jnp.float32)
    B, S = state.shape
    A = action.shape[1]

    # Row tile: single invocation for small batches; 256-row tiles otherwise.
    TB = B if B <= 256 else 256
    grid = (pl.cdiv(B, TB),)

    def rows(ncols):
        return pl.BlockSpec((TB, ncols), lambda i: (i, 0))

    def resident(arr):
        # Full-array block, same block index every grid step -> stays in VMEM.
        return pl.BlockSpec(arr.shape, lambda i: (0, 0))

    p = prepared
    q = pl.pallas_call(
        _critic_kernel,
        out_shape=jax.ShapeDtypeStruct((B, 2), jnp.float32),
        grid=grid,
        in_specs=[rows(S), rows(A),
                  resident(p["ws"]), resident(p["wa"]), resident(p["b14"]),
                  resident(p["w25"]), resident(p["b25"]),
                  resident(p["w36"]), resident(p["b36"])],
        out_specs=rows(2),
        compiler_params=pltpu.CompilerParams(
            dimension_semantics=("parallel",)),
    )(state, action,
      p["ws"], p["wa"], p["b14"],
      p["w25"], p["b25"], p["w36"], p["b36"])

    return q[:, 0:1], q[:, 1:2]


# --------------------------------------------------------------------------
# Parameters
# --------------------------------------------------------------------------
def init_critic_params(key, state_dim, action_dim):
    """PyTorch-layout params: weights (in_features, out_features) f32,
    biases (1, out_features) f32, Kaiming-uniform-ish init."""
    dims = [
        ("w1", "b1", state_dim + action_dim, HID1),
        ("w2", "b2", HID1, HID2),
        ("w3", "b3", HID2, 1),
        ("w4", "b4", state_dim + action_dim, HID1),
        ("w5", "b5", HID1, HID2),
        ("w6", "b6", HID2, 1),
    ]
    params = {}
    keys = jax.random.split(key, 2 * len(dims))
    for i, (wn, bn, fan_in, fan_out) in enumerate(dims):
        bound = 1.0 / math.sqrt(fan_in)
        params[wn] = jax.random.uniform(
            keys[2 * i], (fan_in, fan_out), jnp.float32, -bound, bound)
        params[bn] = jax.random.uniform(
            keys[2 * i + 1], (1, fan_out), jnp.float32, -bound, bound)
    return params


def _pad2d(x, rows, cols):
    return jnp.pad(x, ((0, rows - x.shape[0]), (0, cols - x.shape[1])))


def prepare_critic_params(raw, state_dim, action_dim):
    """Fuse / pad / quantize torch-layout params into the kernel operands.
    Zero padding keeps results exact; weights are stored in bf16."""
    S = state_dim

    # Layer 1: pad each tower to HP1 columns, fuse along lanes, split rows
    # into a `state` part and an `action` part.
    w1p = _pad2d(raw["w1"], raw["w1"].shape[0], HP1)
    w4p = _pad2d(raw["w4"], raw["w4"].shape[0], HP1)
    w14 = jnp.concatenate([w1p, w4p], axis=1)                    # (S+A, 2*HP1)
    ws = w14[:S].astype(jnp.bfloat16)                            # (S,   2*HP1)
    wa = w14[S:].astype(jnp.bfloat16)                            # (A,   2*HP1)
    b14 = jnp.concatenate([_pad2d(raw["b1"], 1, HP1),
                           _pad2d(raw["b4"], 1, HP1)], axis=1)   # (1, 2*HP1) f32

    # Layer 2: pad both towers to (HP1, HP2), pack along lanes.
    w25 = jnp.concatenate([_pad2d(raw["w2"], HP1, HP2),
                           _pad2d(raw["w5"], HP1, HP2)],
                          axis=1).astype(jnp.bfloat16)           # (HP1, 2*HP2)
    b25 = jnp.concatenate([_pad2d(raw["b2"], 1, HP2),
                           _pad2d(raw["b5"], 1, HP2)], axis=1)   # (1, 2*HP2) f32

    # Layer 3: block-diagonal (2*HP2, 2) weight -> lane-packed [q1 | q2].
    w3p = _pad2d(raw["w3"], HP2, 1)
    w6p = _pad2d(raw["w6"], HP2, 1)
    zcol = jnp.zeros((HP2, 1), jnp.float32)
    w36 = jnp.concatenate([jnp.concatenate([w3p, zcol], axis=0),
                           jnp.concatenate([zcol, w6p], axis=0)],
                          axis=1).astype(jnp.bfloat16)           # (2*HP2, 2)
    b36 = jnp.concatenate([raw["b3"], raw["b6"]], axis=1)        # (1, 2) f32

    return dict(ws=ws, wa=wa, b14=b14, w25=w25, b25=b25, w36=w36, b36=b36)


# --------------------------------------------------------------------------
# Pure-JAX reference
# --------------------------------------------------------------------------
def critic_forward_ref(state, action, raw, *, weight_dtype=jnp.float32):
    """Reference. With weight_dtype=bf16 it uses the same rounded weights the
    kernel stores, isolating bf16-activation rounding as the only difference."""
    def w(name):
        return raw[name].astype(weight_dtype).astype(jnp.float32)

    x = jnp.concatenate([state, action], axis=1).astype(jnp.float32)

    def tower(wn1, bn1, wn2, bn2, wn3, bn3):
        h = jnp.maximum(x @ w(wn1) + raw[bn1], 0.0)
        h = jnp.maximum(h @ w(wn2) + raw[bn2], 0.0)
        return h @ w(wn3) + raw[bn3]

    q1 = tower("w1", "b1", "w2", "b2", "w3", "b3")
    q2 = tower("w4", "b4", "w5", "b5", "w6", "b6")
    return q1, q2


# --------------------------------------------------------------------------
# Demo / correctness check
# --------------------------------------------------------------------------
if __name__ == "__main__":
    key = jax.random.PRNGKey(0)
    k_params, k_state, k_action = jax.random.split(key, 3)

    batch = 8
    state_dim = 16
    action_dim = 8

    raw = init_critic_params(k_params, state_dim, action_dim)
    prepared = prepare_critic_params(raw, state_dim, action_dim)

    state = jax.random.normal(k_state, (batch, state_dim), jnp.float32)
    action = jax.random.normal(k_action, (batch, action_dim), jnp.float32)

    q1, q2 = jax.jit(critic_forward)(state, action, prepared)
    q1 = jax.block_until_ready(q1)
    q2 = jax.block_until_ready(q2)

    # Compare against a reference using the same bf16-rounded weights; the
    # remaining difference is bf16 rounding of activations at the MXU inputs.
    q1_ref, q2_ref = critic_forward_ref(state, action, raw,
                                        weight_dtype=jnp.bfloat16)

    assert q1.shape == (batch, 1) and q2.shape == (batch, 1)
    assert jnp.allclose(q1, q1_ref, atol=2e-2, rtol=2e-2)
    assert jnp.allclose(q2, q2_ref, atol=2e-2, rtol=2e-2)

    print("KERNEL_OK")
</pallas_src>

<mosaic_0001>
module attributes {stable_mosaic.version = 11 : i64} {
  func.func @_critic_kernel(%arg0: i32, %arg1: memref<8x16xf32, #tpu.memory_space<vmem>>, %arg2: memref<8x8xf32, #tpu.memory_space<vmem>>, %arg3: memref<16x1024xbf16, #tpu.memory_space<vmem>>, %arg4: memref<8x1024xbf16, #tpu.memory_space<vmem>>, %arg5: memref<1x1024xf32, #tpu.memory_space<vmem>>, %arg6: memref<512x768xbf16, #tpu.memory_space<vmem>>, %arg7: memref<1x768xf32, #tpu.memory_space<vmem>>, %arg8: memref<768x2xbf16, #tpu.memory_space<vmem>>, %arg9: memref<1x2xf32, #tpu.memory_space<vmem>>, %arg10: memref<8x2xf32, #tpu.memory_space<vmem>>) attributes {dimension_semantics = [#tpu.dimension_semantics<parallel>], iteration_bounds = array<i64: 1>, scalar_prefetch = 0 : i64, scratch_operands = 0 : i64, tpu.core_type = #tpu.core_type<tc>, window_params = [{transform_indices = @transform_0, window_bounds = array<i64: 8, 16>}, {transform_indices = @transform_1, window_bounds = array<i64: 8, 8>}, {pipeline_mode = #tpu.pipeline_mode<synchronous>, transform_indices = @transform_2, window_bounds = array<i64: 16, 1024>}, {pipeline_mode = #tpu.pipeline_mode<synchronous>, transform_indices = @transform_3, window_bounds = array<i64: 8, 1024>}, {pipeline_mode = #tpu.pipeline_mode<synchronous>, transform_indices = @transform_4, window_bounds = array<i64: 1, 1024>}, {pipeline_mode = #tpu.pipeline_mode<synchronous>, transform_indices = @transform_5, window_bounds = array<i64: 512, 768>}, {pipeline_mode = #tpu.pipeline_mode<synchronous>, transform_indices = @transform_6, window_bounds = array<i64: 1, 768>}, {pipeline_mode = #tpu.pipeline_mode<synchronous>, transform_indices = @transform_7, window_bounds = array<i64: 768, 2>}, {pipeline_mode = #tpu.pipeline_mode<synchronous>, transform_indices = @transform_8, window_bounds = array<i64: 1, 2>}, {transform_indices = @transform_9, window_bounds = array<i64: 8, 2>}]} {
    %c0 = arith.constant 0 : index
    %c0_0 = arith.constant 0 : index
    %0 = vector.load %arg1[%c0, %c0_0] : memref<8x16xf32, #tpu.memory_space<vmem>>, vector<8x16xf32>
    %1 = arith.truncf %0 : vector<8x16xf32> to vector<8x16xbf16>
    %c0_1 = arith.constant 0 : index
    %c0_2 = arith.constant 0 : index
    %2 = vector.load %arg2[%c0_1, %c0_2] : memref<8x8xf32, #tpu.memory_space<vmem>>, vector<8x8xf32>
    %3 = arith.truncf %2 : vector<8x8xf32> to vector<8x8xbf16>
    %c0_3 = arith.constant 0 : index
    %c0_4 = arith.constant 0 : index
    %4 = vector.load %arg3[%c0_3, %c0_4] : memref<16x1024xbf16, #tpu.memory_space<vmem>>, vector<16x1024xbf16>
    %cst = arith.constant dense<0.000000e+00> : vector<8x1024xf32>
    %5 = tpu.matmul %1, %4, %cst {dimension_numbers = #tpu.dot_dimension_numbers<[1], [0], [0], [1], [0, 0, 1, 1], [], []>} : vector<8x16xbf16>, vector<16x1024xbf16>, vector<8x1024xf32> -> vector<8x1024xf32>
    %c0_5 = arith.constant 0 : index
    %c0_6 = arith.constant 0 : index
    %6 = vector.load %arg4[%c0_5, %c0_6] : memref<8x1024xbf16, #tpu.memory_space<vmem>>, vector<8x1024xbf16>
    %cst_7 = arith.constant dense<0.000000e+00> : vector<8x1024xf32>
    %7 = tpu.matmul %3, %6, %cst_7 {dimension_numbers = #tpu.dot_dimension_numbers<[1], [0], [0], [1], [0, 0, 1, 1], [], []>} : vector<8x8xbf16>, vector<8x1024xbf16>, vector<8x1024xf32> -> vector<8x1024xf32>
    %8 = arith.addf %5, %7 : vector<8x1024xf32>
    %c0_8 = arith.constant 0 : index
    %c0_9 = arith.constant 0 : index
    %9 = vector.load %arg5[%c0_8, %c0_9] : memref<1x1024xf32, #tpu.memory_space<vmem>>, vector<1x1024xf32>
    %10 = vector.broadcast %9 : vector<1x1024xf32> to vector<8x1024xf32>
    %11 = arith.addf %8, %10 : vector<8x1024xf32>
    %cst_10 = arith.constant 0.000000e+00 : f32
    %12 = vector.broadcast %cst_10 : f32 to vector<8x1024xf32>
    %13 = arith.maximumf %11, %12 : vector<8x1024xf32>
    %c0_11 = arith.constant 0 : index
    %c0_12 = arith.constant 0 : index
    %14 = vector.load %arg6[%c0_11, %c0_12] : memref<512x768xbf16, #tpu.memory_space<vmem>>, vector<512x768xbf16>
    %15 = vector.extract_strided_slice %13 {offsets = [0, 0], sizes = [8, 512], strides = [1, 1]} : vector<8x1024xf32> to vector<8x512xf32>
    %16 = arith.truncf %15 : vector<8x512xf32> to vector<8x512xbf16>
    %17 = vector.extract_strided_slice %13 {offsets = [0, 512], sizes = [8, 512], strides = [1, 1]} : vector<8x1024xf32> to vector<8x512xf32>
    %18 = arith.truncf %17 : vector<8x512xf32> to vector<8x512xbf16>
    %19 = vector.extract_strided_slice %14 {offsets = [0, 0], sizes = [512, 384], strides = [1, 1]} : vector<512x768xbf16> to vector<512x384xbf16>
    %cst_13 = arith.constant dense<0.000000e+00> : vector<8x384xf32>
    %20 = tpu.matmul %16, %19, %cst_13 {dimension_numbers = #tpu.dot_dimension_numbers<[1], [0], [0], [1], [0, 0, 1, 1], [], []>} : vector<8x512xbf16>, vector<512x384xbf16>, vector<8x384xf32> -> vector<8x384xf32>
    %21 = vector.extract_strided_slice %14 {offsets = [0, 384], sizes = [512, 384], strides = [1, 1]} : vector<512x768xbf16> to vector<512x384xbf16>
    %cst_14 = arith.constant dense<0.000000e+00> : vector<8x384xf32>
    %22 = tpu.matmul %18, %21, %cst_14 {dimension_numbers = #tpu.dot_dimension_numbers<[1], [0], [0], [1], [0, 0, 1, 1], [], []>} : vector<8x512xbf16>, vector<512x384xbf16>, vector<8x384xf32> -> vector<8x384xf32>
    %23 = tpu.concatenate %20, %22 in 1 : vector<8x384xf32>, vector<8x384xf32> -> vector<8x768xf32>
    %c0_15 = arith.constant 0 : index
    %c0_16 = arith.constant 0 : index
    %24 = vector.load %arg7[%c0_15, %c0_16] : memref<1x768xf32, #tpu.memory_space<vmem>>, vector<1x768xf32>
    %25 = vector.broadcast %24 : vector<1x768xf32> to vector<8x768xf32>
    %26 = arith.addf %23, %25 : vector<8x768xf32>
    %cst_17 = arith.constant 0.000000e+00 : f32
    %27 = vector.broadcast %cst_17 : f32 to vector<8x768xf32>
    %28 = arith.maximumf %26, %27 : vector<8x768xf32>
    %29 = arith.truncf %28 : vector<8x768xf32> to vector<8x768xbf16>
    %c0_18 = arith.constant 0 : index
    %c0_19 = arith.constant 0 : index
    %30 = vector.load %arg8[%c0_18, %c0_19] : memref<768x2xbf16, #tpu.memory_space<vmem>>, vector<768x2xbf16>
    %cst_20 = arith.constant dense<0.000000e+00> : vector<8x2xf32>
    %31 = tpu.matmul %29, %30, %cst_20 {dimension_numbers = #tpu.dot_dimension_numbers<[1], [0], [0], [1], [0, 0, 1, 1], [], []>} : vector<8x768xbf16>, vector<768x2xbf16>, vector<8x2xf32> -> vector<8x2xf32>
    %c0_21 = arith.constant 0 : index
    %c0_22 = arith.constant 0 : index
    %32 = vector.load %arg9[%c0_21, %c0_22] : memref<1x2xf32, #tpu.memory_space<vmem>>, vector<1x2xf32>
    %33 = vector.broadcast %32 : vector<1x2xf32> to vector<8x2xf32>
    %34 = arith.addf %31, %33 : vector<8x2xf32>
    %c0_23 = arith.constant 0 : index
    %c0_24 = arith.constant 0 : index
    %35 = vector.load %arg10[%c0_23, %c0_24] : memref<8x2xf32, #tpu.memory_space<vmem>>, vector<8x2xf32>
    tpu.vector_store %arg10[%c0_23, %c0_24], %34 {strides = array<i32>} : memref<8x2xf32, #tpu.memory_space<vmem>>, vector<8x2xf32>,
    return
  }
  func.func @transform_0(%arg0: i32) -> (i32, i32) {
    %c0_i32 = arith.constant 0 : i32
    %c0_i32_0 = arith.constant 0 : i32
    return %arg0, %c0_i32 : i32, i32
  }
  func.func @transform_1(%arg0: i32) -> (i32, i32) {
    %c0_i32 = arith.constant 0 : i32
    %c0_i32_0 = arith.constant 0 : i32
    return %arg0, %c0_i32 : i32, i32
  }
  func.func @transform_2(%arg0: i32) -> (i32, i32) {
    %c0_i32 = arith.constant 0 : i32
    %c0_i32_0 = arith.constant 0 : i32
    %c0_i32_1 = arith.constant 0 : i32
    return %c0_i32, %c0_i32_0 : i32, i32
  }
  func.func @transform_3(%arg0: i32) -> (i32, i32) {
    %c0_i32 = arith.constant 0 : i32
    %c0_i32_0 = arith.constant 0 : i32
    %c0_i32_1 = arith.constant 0 : i32
    return %c0_i32, %c0_i32_0 : i32, i32
  }
  func.func @transform_4(%arg0: i32) -> (i32, i32) {
    %c0_i32 = arith.constant 0 : i32
    %c0_i32_0 = arith.constant 0 : i32
    %c0_i32_1 = arith.constant 0 : i32
    return %c0_i32, %c0_i32_0 : i32, i32
  }
  func.func @transform_5(%arg0: i32) -> (i32, i32) {
    %c0_i32 = arith.constant 0 : i32
    %c0_i32_0 = arith.constant 0 : i32
    %c0_i32_1 = arith.constant 0 : i32
    return %c0_i32, %c0_i32_0 : i32, i32
  }
  func.func @transform_6(%arg0: i32) -> (i32, i32) {
    %c0_i32 = arith.constant 0 : i32
    %c0_i32_0 = arith.constant 0 : i32
    %c0_i32_1 = arith.constant 0 : i32
    return %c0_i32, %c0_i32_0 : i32, i32
  }
  func.func @transform_7(%arg0: i32) -> (i32, i32) {
    %c0_i32 = arith.constant 0 : i32
    %c0_i32_0 = arith.constant 0 : i32
    %c0_i32_1 = arith.constant 0 : i32
    return %c0_i32, %c0_i32_0 : i32, i32
  }
  func.func @transform_8(%arg0: i32) -> (i32, i32) {
    %c0_i32 = arith.constant 0 : i32
    %c0_i32_0 = arith.constant 0 : i32
    %c0_i32_1 = arith.constant 0 : i32
    return %c0_i32, %c0_i32_0 : i32, i32
  }
  func.func @transform_9(%arg0: i32) -> (i32, i32) {
    %c0_i32 = arith.constant 0 : i32
    %c0_i32_0 = arith.constant 0 : i32
    return %arg0, %c0_i32 : i32, i32
  }
}

</mosaic_0001>

<llo_original>
// kernel: critic_forward.1
$region0: #{critic_forward.1}
  #allocation0 [shape = 'u32[]', space=smem, size = 0x4, offset = 0x4, fixed_abs, tag = 'smem constant byte address 0x4 - core index']
  #allocation1 [shape = 'u32[72,128]{1,0:T(1,128)}', space=vmem, size = 0x9000, scoped, tag = 'internal scratch']
  %s0 = inlined_call_operand.vmem [shape: f32[8,16], index: 0, kind: input, shape index: {}]
  %s1 = inlined_call_operand.vmem [shape: f32[8,8], index: 1, kind: input, shape index: {}]
  %s2 = inlined_call_operand.vmem [shape: bf16[16,1024], index: 2, kind: input, shape index: {}]
  %s3 = inlined_call_operand.vmem [shape: bf16[8,1024], index: 3, kind: input, shape index: {}]
  %s4 = inlined_call_operand.vmem [shape: f32[1,1024], index: 4, kind: input, shape index: {}]
  %s5 = inlined_call_operand.hbm [shape: bf16[512,768], index: 5, kind: input, shape index: {}]
  %s6 = inlined_call_operand.vmem [shape: f32[1,768], index: 6, kind: input, shape index: {}]
  %s7 = inlined_call_operand.vmem [shape: bf16[768,2], index: 7, kind: input, shape index: {}]
  %s8 = inlined_call_operand.vmem [shape: f32[1,2], index: 8, kind: input, shape index: {}]
  %s9 = inlined_call_operand.vmem [shape: f32[8,2], index: 9, kind: output, shape index: {}]
  %s10 = sld [smem:[#allocation0]]
  $region50: #{critic_forward.1} parent=0
    _
  %s12 = ssub.s32 1, %s10
  %s13 = scalar_select 0, %s12, %s10
  $region1: #{critic_forward.1} parent=0
    #allocation2 [shape = 'u8[786432]{0}', space=vmem, size = 0xc0000, scoped, tag = 'input window, operand 5, single buffered']
    #allocation3 [shape = 's32[1]{0}', space=sflag, size = 0x4, scoped, tag = 'scoped memory for critic_forward.1']
    %14 = vsyncpa [#allocation3], 0
    // Predicated region
    $region2: #{critic_forward.1} parent=1 // pred_check
      _
    $region3: #{critic_forward.1} parent=1 // pred_check_branch
      %16 = sbr.rel (0) target = $region5
    $region4: #{critic_forward.1} parent=1 // pred_region
      _
    $region5: #{critic_forward.1} parent=1 // pred_fallthru
      _
    // Predicated region
    $region6: #{critic_forward.1} parent=1 // pred_check
      _
    $region7: #{critic_forward.1} parent=1 // pred_check_branch
      %18 = sbr.rel (0) target = $region9
    $region8: #{critic_forward.1} parent=1 // pred_region
      _
    $region9: #{critic_forward.1} parent=1 // pred_fallthru
      _
    // Predicated region
    $region10: #{critic_forward.1} parent=1 // pred_check
      _
    $region11: #{critic_forward.1} parent=1 // pred_check_branch
      %20 = sbr.rel (0) target = $region13
    $region12: #{critic_forward.1} parent=1 // pred_region
      _
    $region13: #{critic_forward.1} parent=1 // pred_fallthru
      _
    // Predicated region
    $region14: #{critic_forward.1} parent=1 // pred_check
      _
    $region15: #{critic_forward.1} parent=1 // pred_check_branch
      %22 = sbr.rel (0) target = $region17
    $region16: #{critic_forward.1} parent=1 // pred_region
      _
    $region17: #{critic_forward.1} parent=1 // pred_fallthru
      _
    // Predicated region
    $region18: #{critic_forward.1} parent=1 // pred_check
      _
    $region19: #{critic_forward.1} parent=1 // pred_check_branch
      %24 = sbr.rel (0) target = $region21
    $region20: #{critic_forward.1} parent=1 // pred_region
      _
    $region21: #{critic_forward.1} parent=1 // pred_fallthru
      _
    // Predicated region
    $region22: #{critic_forward.1} parent=1 // pred_check
      _
    $region23: #{critic_forward.1} parent=1 // pred_check_branch
      %26 = sbr.rel (0) target = $region25
    $region24: #{critic_forward.1} parent=1 // pred_region
      %28 = vsyncadd [#allocation3], 0
      %s29 = sshll.u32 %s5, 4
      %s30 = int_to_ptr.hbm [resolvable:$true] %s29
      %s31 = sshll.u32 [#allocation2], 4
      %s32 = int_to_ptr.vmem [resolvable:$true] %s31
      %37 = dma.hbm_to_vmem [thread:$0]  %s30, 24576, %s32, [#allocation3], 384, 384, 24
    $region25: #{critic_forward.1} parent=1 // pred_fallthru
      _
    // Predicated region
    $region26: #{critic_forward.1} parent=1 // pred_check
      _
    $region27: #{critic_forward.1} parent=1 // pred_check_branch
      %39 = sbr.rel (0) target = $region29
    $region28: #{critic_forward.1} parent=1 // pred_region
      _
    $region29: #{critic_forward.1} parent=1 // pred_fallthru
      _
    // Predicated region
    $region30: #{critic_forward.1} parent=1 // pred_check
      _
    $region31: #{critic_forward.1} parent=1 // pred_check_branch
      %41 = sbr.rel (0) target = $region33
    $region32: #{critic_forward.1} parent=1 // pred_region
      _
    $region33: #{critic_forward.1} parent=1 // pred_fallthru
      _
    // Predicated region
    $region34: #{critic_forward.1} parent=1 // pred_check
      _
    $region35: #{critic_forward.1} parent=1 // pred_check_branch
      %43 = sbr.rel (0) target = $region37
    $region36: #{critic_forward.1} parent=1 // pred_region
      _
    $region37: #{critic_forward.1} parent=1 // pred_fallthru
      _
    // Predicated region
    $region38: #{critic_forward.1} parent=1 // pred_check
      _
    $region39: #{critic_forward.1} parent=1 // pred_check_branch
      %45 = sbr.rel (0) target = $region41
    $region40: #{critic_forward.1} parent=1 // pred_region
      %47 = dma.done [#allocation3], 24576
    $region41: #{critic_forward.1} parent=1 // pred_fallthru
      _
    %v49 = vld [vmem:[%s0] sm:$0xff]
    %v50 = vpack.c.bf16 %v49, %v49
    %v51 = vld [vmem:[%s1] sm:$0xff]
    %v52 = vpack.c.bf16 %v51, %v51
    %v53 = vld [vmem:[%s2] sm:$0xff]
    %v54 = vld [vmem:[%s2 + $0x8] sm:$0xff]
    %v55 = vld [vmem:[%s2 + $0x10] sm:$0xff]
    %v56 = vld [vmem:[%s2 + $0x18] sm:$0xff]
    %v57 = vld [vmem:[%s2 + $0x20] sm:$0xff]
    %v58 = vld [vmem:[%s2 + $0x28] sm:$0xff]
    %v59 = vld [vmem:[%s2 + $0x30] sm:$0xff]
    %v60 = vld [vmem:[%s2 + $0x38] sm:$0xff]
    %v61 = vld [vmem:[%s3] sm:$0xff]
    %v62 = vld [vmem:[%s3 + $0x8] sm:$0xff]
    %v63 = vld [vmem:[%s3 + $0x10] sm:$0xff]
    %v64 = vld [vmem:[%s3 + $0x18] sm:$0xff]
    %v69 = vunpack.c.l.b16 %v61
    %v70 = vunpack.c.h.b16 %v61
    %v71 = vunpack.c.l.b16 %v62
    %v72 = vunpack.c.h.b16 %v62
    %v73 = vunpack.c.l.b16 %v63
    %v74 = vunpack.c.h.b16 %v63
    %v75 = vunpack.c.l.b16 %v64
    %v76 = vunpack.c.h.b16 %v64
    %v77 = vpack.c.b16 %v69, %v69
    %v78 = vpack.c.b16 %v70, %v70
    %v79 = vpack.c.b16 %v71, %v71
    %v80 = vpack.c.b16 %v72, %v72
    %v81 = vpack.c.b16 %v73, %v73
    %v82 = vpack.c.b16 %v74, %v74
    %v83 = vpack.c.b16 %v75, %v75
    %v84 = vpack.c.b16 %v76, %v76
    %vm85 = vcmask 64512
    %v87 = vsel %vm85, %v52, 0
    %vm89 = vcmask 1043456
    %v91 = vsel %vm89, %v77, 0
    %v94 = vsel %vm89, %v78, 0
    %v97 = vsel %vm89, %v79, 0
    %v100 = vsel %vm89, %v80, 0
    %v103 = vsel %vm89, %v81, 0
    %v106 = vsel %vm89, %v82, 0
    %v109 = vsel %vm89, %v83, 0
    %v112 = vsel %vm89, %v84, 0
    %114 = vmatpush.bf16.msra.mxu0 0
    %115 = vmatpush.bf16.msra.mxu0 0
    %116 = vmatpush.bf16.msra.mxu0 0
    %117 = vmatpush.bf16.msra.mxu0 0
    %118 = vmatpush.bf16.msra.mxu0 0
    %119 = vmatpush.bf16.msra.mxu0 0
    %120 = vmatpush.bf16.msra.mxu0 0
    %121 = vmatpush.bf16.msra.mxu0 %v91
    %122 = vmatmul.bf16.gmra.mxu0 %v87
    %v123 = vpop.f32.mrf.mxu0
    %v124 = vadd.f32 0.0, %v123
    %v125 = vpop.f32.mrf.mxu0
    %126 = vdwg.mxu0
    %127 = vmatpush.bf16.msra.mxu0 0
    %128 = vmatpush.bf16.msra.mxu0 0
    %129 = vmatpush.bf16.msra.mxu0 0
    %130 = vmatpush.bf16.msra.mxu0 0
    %131 = vmatpush.bf16.msra.mxu0 0
    %132 = vmatpush.bf16.msra.mxu0 0
    %133 = vmatpush.bf16.msra.mxu0 0
    %134 = vmatpush.bf16.msra.mxu0 %v94
    %135 = vmatmul.bf16.gmra.mxu0 %v87
    %v136 = vpop.f32.mrf.mxu0
    %v137 = vadd.f32 0.0, %v136
    %v138 = vpop.f32.mrf.mxu0
    %139 = vdwg.mxu0
    %140 = vmatpush.bf16.msra.mxu0 0
    %141 = vmatpush.bf16.msra.mxu0 0
    %142 = vmatpush.bf16.msra.mxu0 0
    %143 = vmatpush.bf16.msra.mxu0 0
    %144 = vmatpush.bf16.msra.mxu0 0
    %145 = vmatpush.bf16.msra.mxu0 0
    %146 = vmatpush.bf16.msra.mxu0 0
    %147 = vmatpush.bf16.msra.mxu0 %v97
    %148 = vmatmul.bf16.gmra.mxu0 %v87
    %v149 = vpop.f32.mrf.mxu0
    %v150 = vadd.f32 0.0, %v149
    %v151 = vpop.f32.mrf.mxu0
    %152 = vdwg.mxu0
    %153 = vmatpush.bf16.msra.mxu0 0
    %154 = vmatpush.bf16.msra.mxu0 0
    %155 = vmatpush.bf16.msra.mxu0 0
    %156 = vmatpush.bf16.msra.mxu0 0
    %157 = vmatpush.bf16.msra.mxu0 0
    %158 = vmatpush.bf16.msra.mxu0 0
    %159 = vmatpush.bf16.msra.mxu0 0
    %160 = vmatpush.bf16.msra.mxu0 %v100
    %161 = vmatmul.bf16.gmra.mxu0 %v87
    %v162 = vpop.f32.mrf.mxu0
    %v163 = vadd.f32 0.0, %v162
    %v164 = vpop.f32.mrf.mxu0
    %165 = vdwg.mxu0
    %166 = vmatpush.bf16.msra.mxu0 0
    %167 = vmatpush.bf16.msra.mxu0 0
    %168 = vmatpush.bf16.msra.mxu0 0
    %169 = vmatpush.bf16.msra.mxu0 0
    %170 = vmatpush.bf16.msra.mxu0 0
    %171 = vmatpush.bf16.msra.mxu0 0
    %172 = vmatpush.bf16.msra.mxu0 0
    %173 = vmatpush.bf16.msra.mxu0 %v103
    %174 = vmatmul.bf16.gmra.mxu0 %v87
    %v175 = vpop.f32.mrf.mxu0
    %v176 = vadd.f32 0.0, %v175
    %v177 = vpop.f32.mrf.mxu0
    %178 = vdwg.mxu0
    %179 = vmatpush.bf16.msra.mxu0 0
    %180 = vmatpush.bf16.msra.mxu0 0
    %181 = vmatpush.bf16.msra.mxu0 0
    %182 = vmatpush.bf16.msra.mxu0 0
    %183 = vmatpush.bf16.msra.mxu0 0
    %184 = vmatpush.bf16.msra.mxu0 0
    %185 = vmatpush.bf16.msra.mxu0 0
    %186 = vmatpush.bf16.msra.mxu0 %v106
    %187 = vmatmul.bf16.gmra.mxu0 %v87
    %v188 = vpop.f32.mrf.mxu0
    %v189 = vadd.f32 0.0, %v188
    %v190 = vpop.f32.mrf.mxu0
    %191 = vdwg.mxu0
    %192 = vmatpush.bf16.msra.mxu0 0
    %193 = vmatpush.bf16.msra.mxu0 0
    %194 = vmatpush.bf16.msra.mxu0 0
    %195 = vmatpush.bf16.msra.mxu0 0
    %196 = vmatpush.bf16.msra.mxu0 0
    %197 = vmatpush.bf16.msra.mxu0 0
    %198 = vmatpush.bf16.msra.mxu0 0
    %199 = vmatpush.bf16.msra.mxu0 %v109
    %200 = vmatmul.bf16.gmra.mxu0 %v87
    %v201 = vpop.f32.mrf.mxu0
    %v202 = vadd.f32 0.0, %v201
    %v203 = vpop.f32.mrf.mxu0
    %204 = vdwg.mxu0
    %205 = vmatpush.bf16.msra.mxu0 0
    %206 = vmatpush.bf16.msra.mxu0 0
    %207 = vmatpush.bf16.msra.mxu0 0
    %208 = vmatpush.bf16.msra.mxu0 0
    %209 = vmatpush.bf16.msra.mxu0 0
    %210 = vmatpush.bf16.msra.mxu0 0
    %211 = vmatpush.bf16.msra.mxu0 0
    %212 = vmatpush.bf16.msra.mxu0 %v112
    %213 = vmatmul.bf16.gmra.mxu0 %v87
    %v214 = vpop.f32.mrf.mxu0
    %v215 = vadd.f32 0.0, %v214
    %v216 = vpop.f32.mrf.mxu0
    %217 = vdwg.mxu0
    %v226 = vunpack.c.l.b16 %v53
    %v227 = vunpack.c.h.b16 %v53
    %v228 = vunpack.c.l.b16 %v54
    %v229 = vunpack.c.h.b16 %v54
    %v230 = vunpack.c.l.b16 %v55
    %v231 = vunpack.c.h.b16 %v55
    %v232 = vunpack.c.l.b16 %v56
    %v233 = vunpack.c.h.b16 %v56
    %v234 = vunpack.c.l.b16 %v57
    %v235 = vunpack.c.h.b16 %v57
    %v236 = vunpack.c.l.b16 %v58
    %v237 = vunpack.c.h.b16 %v58
    %v238 = vunpack.c.l.b16 %v59
    %v239 = vunpack.c.h.b16 %v59
    %v240 = vunpack.c.l.b16 %v60
    %v241 = vunpack.c.h.b16 %v60
    %v242 = vpack.c.b16 %v234, %v226
    %v243 = vpack.c.b16 %v235, %v227
    %v244 = vpack.c.b16 %v236, %v228
    %v245 = vpack.c.b16 %v237, %v229
    %v246 = vpack.c.b16 %v238, %v230
    %v247 = vpack.c.b16 %v239, %v231
    %v248 = vpack.c.b16 %v240, %v232
    %v249 = vpack.c.b16 %v241, %v233
    %vm258 = vcmask 130048
    %v260 = vsel %vm258, %v50, 0
    %262 = vmatpush.bf16.msra.mxu0 0
    %263 = vmatpush.bf16.msra.mxu0 0
    %264 = vmatpush.bf16.msra.mxu0 0
    %265 = vmatpush.bf16.msra.mxu0 0
    %266 = vmatpush.bf16.msra.mxu0 0
    %267 = vmatpush.bf16.msra.mxu0 0
    %268 = vmatpush.bf16.msra.mxu0 0
    %269 = vmatpush.bf16.msra.mxu0 %v242
    %270 = vmatmul.bf16.gmra.mxu0 %v260
    %v271 = vpop.f32.mrf.mxu0
    %v272 = vadd.f32 %v124, %v271
    %v273 = vpop.f32.mrf.mxu0
    %274 = vdwg.mxu0
    %275 = vmatpush.bf16.msra.mxu0 0
    %276 = vmatpush.bf16.msra.mxu0 0
    %277 = vmatpush.bf16.msra.mxu0 0
    %278 = vmatpush.bf16.msra.mxu0 0
    %279 = vmatpush.bf16.msra.mxu0 0
    %280 = vmatpush.bf16.msra.mxu0 0
    %281 = vmatpush.bf16.msra.mxu0 0
    %282 = vmatpush.bf16.msra.mxu0 %v243
    %283 = vmatmul.bf16.gmra.mxu0 %v260
    %v284 = vpop.f32.mrf.mxu0
    %v285 = vadd.f32 %v137, %v284
    %v286 = vpop.f32.mrf.mxu0
    %287 = vdwg.mxu0
    %288 = vmatpush.bf16.msra.mxu0 0
    %289 = vmatpush.bf16.msra.mxu0 0
    %290 = vmatpush.bf16.msra.mxu0 0
    %291 = vmatpush.bf16.msra.mxu0 0
    %292 = vmatpush.bf16.msra.mxu0 0
    %293 = vmatpush.bf16.msra.mxu0 0
    %294 = vmatpush.bf16.msra.mxu0 0
    %295 = vmatpush.bf16.msra.mxu0 %v244
    %296 = vmatmul.bf16.gmra.mxu0 %v260
    %v297 = vpop.f32.mrf.mxu0
    %v298 = vadd.f32 %v150, %v297
    %v299 = vpop.f32.mrf.mxu0
    %300 = vdwg.mxu0
    %301 = vmatpush.bf16.msra.mxu0 0
    %302 = vmatpush.bf16.msra.mxu0 0
    %303 = vmatpush.bf16.msra.mxu0 0
    %304 = vmatpush.bf16.msra.mxu0 0
    %305 = vmatpush.bf16.msra.mxu0 0
    %306 = vmatpush.bf16.msra.mxu0 0
    %307 = vmatpush.bf16.msra.mxu0 0
    %308 = vmatpush.bf16.msra.mxu0 %v245
    %309 = vmatmul.bf16.gmra.mxu0 %v260
    %v310 = vpop.f32.mrf.mxu0
    %v311 = vadd.f32 %v163, %v310
    %v312 = vpop.f32.mrf.mxu0
    %313 = vdwg.mxu0
    %314 = vmatpush.bf16.msra.mxu0 0
    %315 = vmatpush.bf16.msra.mxu0 0
    %316 = vmatpush.bf16.msra.mxu0 0
    %317 = vmatpush.bf16.msra.mxu0 0
    %318 = vmatpush.bf16.msra.mxu0 0
    %319 = vmatpush.bf16.msra.mxu0 0
    %320 = vmatpush.bf16.msra.mxu0 0
    %321 = vmatpush.bf16.msra.mxu0 %v246
    %322 = vmatmul.bf16.gmra.mxu0 %v260
    %v323 = vpop.f32.mrf.mxu0
    %v324 = vadd.f32 %v176, %v323
    %v325 = vpop.f32.mrf.mxu0
    %326 = vdwg.mxu0
    %327 = vmatpush.bf16.msra.mxu0 0
    %328 = vmatpush.bf16.msra.mxu0 0
    %329 = vmatpush.bf16.msra.mxu0 0
    %330 = vmatpush.bf16.msra.mxu0 0
    %331 = vmatpush.bf16.msra.mxu0 0
    %332 = vmatpush.bf16.msra.mxu0 0
    %333 = vmatpush.bf16.msra.mxu0 0
    %334 = vmatpush.bf16.msra.mxu0 %v247
    %335 = vmatmul.bf16.gmra.mxu0 %v260
    %v336 = vpop.f32.mrf.mxu0
    %v337 = vadd.f32 %v189, %v336
    %v338 = vpop.f32.mrf.mxu0
    %339 = vdwg.mxu0
    %340 = vmatpush.bf16.msra.mxu0 0
    %341 = vmatpush.bf16.msra.mxu0 0
    %342 = vmatpush.bf16.msra.mxu0 0
    %343 = vmatpush.bf16.msra.mxu0 0
    %344 = vmatpush.bf16.msra.mxu0 0
    %345 = vmatpush.bf16.msra.mxu0 0
    %346 = vmatpush.bf16.msra.mxu0 0
    %347 = vmatpush.bf16.msra.mxu0 %v248
    %348 = vmatmul.bf16.gmra.mxu0 %v260
    %v349 = vpop.f32.mrf.mxu0
    %v350 = vadd.f32 %v202, %v349
    %v351 = vpop.f32.mrf.mxu0
    %352 = vdwg.mxu0
    %353 = vmatpush.bf16.msra.mxu0 0
    %354 = vmatpush.bf16.msra.mxu0 0
    %355 = vmatpush.bf16.msra.mxu0 0
    %356 = vmatpush.bf16.msra.mxu0 0
    %357 = vmatpush.bf16.msra.mxu0 0
    %358 = vmatpush.bf16.msra.mxu0 0
    %359 = vmatpush.bf16.msra.mxu0 0
    %360 = vmatpush.bf16.msra.mxu0 %v249
    %361 = vmatmul.bf16.gmra.mxu0 %v260
    %v362 = vpop.f32.mrf.mxu0
    %v363 = vadd.f32 %v215, %v362
    %v364 = vpop.f32.mrf.mxu0
    %365 = vdwg.mxu0
    %v366 = vld [vmem:[%s4] sm:$0xff]
    %v368 = vperm.slane %v366, 0
    %v369 = vperm.slane %v366, 1
    %v370 = vperm.slane %v366, 2
    %v371 = vperm.slane %v366, 3
    %v372 = vperm.slane %v366, 4
    %v373 = vperm.slane %v366, 5
    %v374 = vperm.slane %v366, 6
    %v375 = vperm.slane %v366, 7
    %v384 = vadd.f32 %v272, %v368
    %v385 = vadd.f32 %v285, %v369
    %v386 = vadd.f32 %v298, %v370
    %v387 = vadd.f32 %v311, %v371
    %v388 = vadd.f32 %v324, %v372
    %v389 = vadd.f32 %v337, %v373
    %v390 = vadd.f32 %v350, %v374
    %v391 = vadd.f32 %v363, %v375
    %v392 = vmax.f32 %v384, 0.0
    %v393 = vmax.f32 %v385, 0.0
    %v394 = vmax.f32 %v386, 0.0
    %v395 = vmax.f32 %v387, 0.0
    %v396 = vmax.f32 %v388, 0.0
    %v397 = vmax.f32 %v389, 0.0
    %v398 = vmax.f32 %v390, 0.0
    %v399 = vmax.f32 %v391, 0.0
    %v400 = vld [vmem:[#allocation2] sm:$0xff]
    %v401 = vld [vmem:[#allocation2 + $0x8] sm:$0xff]
    %v402 = vld [vmem:[#allocation2 + $0x10] sm:$0xff]
    %v403 = vld [vmem:[#allocation2 + $0x18] sm:$0xff]
    %v404 = vld [vmem:[#allocation2 + $0x20] sm:$0xff]
    %v405 = vld [vmem:[#allocation2 + $0x28] sm:$0xff]
    %v406 = vld [vmem:[#allocation2 + $0x30] sm:$0xff]
    %v407 = vld [vmem:[#allocation2 + $0x38] sm:$0xff]
    %v408 = vld [vmem:[#allocation2 + $0x40] sm:$0xff]
    %v409 = vld [vmem:[#allocation2 + $0x48] sm:$0xff]
    %v410 = vld [vmem:[#allocation2 + $0x50] sm:$0xff]
    %v411 = vld [vmem:[#allocation2 + $0x58] sm:$0xff]
    %v412 = vld [vmem:[#allocation2 + $0x60] sm:$0xff]
    %v413 = vld [vmem:[#allocation2 + $0x68] sm:$0xff]
    %v414 = vld [vmem:[#allocation2 + $0x70] sm:$0xff]
    %v415 = vld [vmem:[#allocation2 + $0x78] sm:$0xff]
    %v416 = vld [vmem:[#allocation2 + $0x80] sm:$0xff]
    %v417 = vld [vmem:[#allocation2 + $0x88] sm:$0xff]
    %v418 = vld [vmem:[#allocation2 + $0x90] sm:$0xff]
    %v419 = vld [vmem:[#allocation2 + $0x98] sm:$0xff]
    %v420 = vld [vmem:[#allocation2 + $0xa0] sm:$0xff]
    %v421 = vld [vmem:[#allocation2 + $0xa8] sm:$0xff]
    %v422 = vld [vmem:[#allocation2 + $0xb0] sm:$0xff]
    %v423 = vld [vmem:[#allocation2 + $0xb8] sm:$0xff]
    %v424 = vld [vmem:[#allocation2 + $0xc0] sm:$0xff]
    %v425 = vld [vmem:[#allocation2 + $0xc8] sm:$0xff]
    %v426 = vld [vmem:[#allocation2 + $0xd0] sm:$0xff]
    %v427 = vld [vmem:[#allocation2 + $0xd8] sm:$0xff]
    %v428 = vld [vmem:[#allocation2 + $0xe0] sm:$0xff]
    %v429 = vld [vmem:[#allocation2 + $0xe8] sm:$0xff]
    %v430 = vld [vmem:[#allocation2 + $0xf0] sm:$0xff]
    %v431 = vld [vmem:[#allocation2 + $0xf8] sm:$0xff]
    %v432 = vld [vmem:[#allocation2 + $0x100] sm:$0xff]
    %v433 = vld [vmem:[#allocation2 + $0x108] sm:$0xff]
    %v434 = vld [vmem:[#allocation2 + $0x110] sm:$0xff]
    %v435 = vld [vmem:[#allocation2 + $0x118] sm:$0xff]
    %v436 = vld [vmem:[#allocation2 + $0x120] sm:$0xff]
    %v437 = vld [vmem:[#allocation2 + $0x128] sm:$0xff]
    %v438 = vld [vmem:[#allocation2 + $0x130] sm:$0xff]
    %v439 = vld [vmem:[#allocation2 + $0x138] sm:$0xff]
    %v440 = vld [vmem:[#allocation2 + $0x140] sm:$0xff]
    %v441 = vld [vmem:[#allocation2 + $0x148] sm:$0xff]
    %v442 = vld [vmem:[#allocation2 + $0x150] sm:$0xff]
    %v443 = vld [vmem:[#allocation2 + $0x158] sm:$0xff]
    %v444 = vld [vmem:[#allocation2 + $0x160] sm:$0xff]
    %v445 = vld [vmem:[#allocation2 + $0x168] sm:$0xff]
    %v446 = vld [vmem:[#allocation2 + $0x170] sm:$0xff]
    %v447 = vld [vmem:[#allocation2 + $0x178] sm:$0xff]
    %v448 = vld [vmem:[#allocation2 + $0x180] sm:$0xff]
    %v449 = vld [vmem:[#allocation2 + $0x188] sm:$0xff]
    %v450 = vld [vmem:[#allocation2 + $0x190] sm:$0xff]
    %v451 = vld [vmem:[#allocation2 + $0x198] sm:$0xff]
    %v452 = vld [vmem:[#allocation2 + $0x1a0] sm:$0xff]
    %v453 = vld [vmem:[#allocation2 + $0x1a8] sm:$0xff]
    %v454 = vld [vmem:[#allocation2 + $0x1b0] sm:$0xff]
    %v455 = vld [vmem:[#allocation2 + $0x1b8] sm:$0xff]
    %v456 = vld [vmem:[#allocation2 + $0x1c0] sm:$0xff]
    %v457 = vld [vmem:[#allocation2 + $0x1c8] sm:$0xff]
    %v458 = vld [vmem:[#allocation2 + $0x1d0] sm:$0xff]
    %v459 = vld [vmem:[#allocation2 + $0x1d8] sm:$0xff]
    %v460 = vld [vmem:[#allocation2 + $0x1e0] sm:$0xff]
    %v461 = vld [vmem:[#allocation2 + $0x1e8] sm:$0xff]
    %v462 = vld [vmem:[#allocation2 + $0x1f0] sm:$0xff]
    %v463 = vld [vmem:[#allocation2 + $0x1f8] sm:$0xff]
    %v464 = vld [vmem:[#allocation2 + $0x200] sm:$0xff]
    %v465 = vld [vmem:[#allocation2 + $0x208] sm:$0xff]
    %v466 = vld [vmem:[#allocation2 + $0x210] sm:$0xff]
    %v467 = vld [vmem:[#allocation2 + $0x218] sm:$0xff]
    %v468 = vld [vmem:[#allocation2 + $0x220] sm:$0xff]
    %v469 = vld [vmem:[#allocation2 + $0x228] sm:$0xff]
    %v470 = vld [vmem:[#allocation2 + $0x230] sm:$0xff]
    %v471 = vld [vmem:[#allocation2 + $0x238] sm:$0xff]
    %v472 = vld [vmem:[#allocation2 + $0x240] sm:$0xff]
    %v473 = vld [vmem:[#allocation2 + $0x248] sm:$0xff]
    %v474 = vld [vmem:[#allocation2 + $0x250] sm:$0xff]
    %v475 = vld [vmem:[#allocation2 + $0x258] sm:$0xff]
    %v476 = vld [vmem:[#allocation2 + $0x260] sm:$0xff]
    %v477 = vld [vmem:[#allocation2 + $0x268] sm:$0xff]
    %v478 = vld [vmem:[#allocation2 + $0x270] sm:$0xff]
    %v479 = vld [vmem:[#allocation2 + $0x278] sm:$0xff]
    %v480 = vld [vmem:[#allocation2 + $0x280] sm:$0xff]
    %v481 = vld [vmem:[#allocation2 + $0x288] sm:$0xff]
    %v482 = vld [vmem:[#allocation2 + $0x290] sm:$0xff]
    %v483 = vld [vmem:[#allocation2 + $0x298] sm:$0xff]
    %v484 = vld [vmem:[#allocation2 + $0x2a0] sm:$0xff]
    %v485 = vld [vmem:[#allocation2 + $0x2a8] sm:$0xff]
    %v486 = vld [vmem:[#allocation2 + $0x2b0] sm:$0xff]
    %v487 = vld [vmem:[#allocation2 + $0x2b8] sm:$0xff]
    %v488 = vld [vmem:[#allocation2 + $0x2c0] sm:$0xff]
    %v489 = vld [vmem:[#allocation2 + $0x2c8] sm:$0xff]
    %v490 = vld [vmem:[#allocation2 + $0x2d0] sm:$0xff]
    %v491 = vld [vmem:[#allocation2 + $0x2d8] sm:$0xff]
    %v492 = vld [vmem:[#allocation2 + $0x2e0] sm:$0xff]
    %v493 = vld [vmem:[#allocation2 + $0x2e8] sm:$0xff]
    %v494 = vld [vmem:[#allocation2 + $0x2f0] sm:$0xff]
    %v495 = vld [vmem:[#allocation2 + $0x2f8] sm:$0xff]
    %v496 = vld [vmem:[#allocation2 + $0x300] sm:$0xff]
    %v497 = vld [vmem:[#allocation2 + $0x308] sm:$0xff]
    %v498 = vld [vmem:[#allocation2 + $0x310] sm:$0xff]
    %v499 = vld [vmem:[#allocation2 + $0x318] sm:$0xff]
    %v500 = vld [vmem:[#allocation2 + $0x320] sm:$0xff]
    %v501 = vld [vmem:[#allocation2 + $0x328] sm:$0xff]
    %v502 = vld [vmem:[#allocation2 + $0x330] sm:$0xff]
    %v503 = vld [vmem:[#allocation2 + $0x338] sm:$0xff]
    %v504 = vld [vmem:[#allocation2 + $0x340] sm:$0xff]
    %v505 = vld [vmem:[#allocation2 + $0x348] sm:$0xff]
    %v506 = vld [vmem:[#allocation2 + $0x350] sm:$0xff]
    %v507 = vld [vmem:[#allocation2 + $0x358] sm:$0xff]
    %v508 = vld [vmem:[#allocation2 + $0x360] sm:$0xff]
    %v509 = vld [vmem:[#allocation2 + $0x368] sm:$0xff]
    %v510 = vld [vmem:[#allocation2 + $0x370] sm:$0xff]
    %v511 = vld [vmem:[#allocation2 + $0x378] sm:$0xff]
    %v512 = vld [vmem:[#allocation2 + $0x380] sm:$0xff]
    %v513 = vld [vmem:[#allocation2 + $0x388] sm:$0xff]
    %v514 = vld [vmem:[#allocation2 + $0x390] sm:$0xff]
    %v515 = vld [vmem:[#allocation2 + $0x398] sm:$0xff]
    %v516 = vld [vmem:[#allocation2 + $0x3a0] sm:$0xff]
    %v517 = vld [vmem:[#allocation2 + $0x3a8] sm:$0xff]
    %v518 = vld [vmem:[#allocation2 + $0x3b0] sm:$0xff]
    %v519 = vld [vmem:[#allocation2 + $0x3b8] sm:$0xff]
    %v520 = vld [vmem:[#allocation2 + $0x3c0] sm:$0xff]
    %v521 = vld [vmem:[#allocation2 + $0x3c8] sm:$0xff]
    %v522 = vld [vmem:[#allocation2 + $0x3d0] sm:$0xff]
    %v523 = vld [vmem:[#allocation2 + $0x3d8] sm:$0xff]
    %v524 = vld [vmem:[#allocation2 + $0x3e0] sm:$0xff]
    %v525 = vld [vmem:[#allocation2 + $0x3e8] sm:$0xff]
    %v526 = vld [vmem:[#allocation2 + $0x3f0] sm:$0xff]
    %v527 = vld [vmem:[#allocation2 + $0x3f8] sm:$0xff]
    %v528 = vld [vmem:[#allocation2 + $0x400] sm:$0xff]
    %v529 = vld [vmem:[#allocation2 + $0x408] sm:$0xff]
    %v530 = vld [vmem:[#allocation2 + $0x410] sm:$0xff]
    %v531 = vld [vmem:[#allocation2 + $0x418] sm:$0xff]
    %v532 = vld [vmem:[#allocation2 + $0x420] sm:$0xff]
    %v533 = vld [vmem:[#allocation2 + $0x428] sm:$0xff]
    %v534 = vld [vmem:[#allocation2 + $0x430] sm:$0xff]
    %v535 = vld [vmem:[#allocation2 + $0x438] sm:$0xff]
    %v536 = vld [vmem:[#allocation2 + $0x440] sm:$0xff]
    %v537 = vld [vmem:[#allocation2 + $0x448] sm:$0xff]
    %v538 = vld [vmem:[#allocation2 + $0x450] sm:$0xff]
    %v539 = vld [vmem:[#allocation2 + $0x458] sm:$0xff]
    %v540 = vld [vmem:[#allocation2 + $0x460] sm:$0xff]
    %v541 = vld [vmem:[#allocation2 + $0x468] sm:$0xff]
    %v542 = vld [vmem:[#allocation2 + $0x470] sm:$0xff]
    %v543 = vld [vmem:[#allocation2 + $0x478] sm:$0xff]
    %v544 = vld [vmem:[#allocation2 + $0x480] sm:$0xff]
    %v545 = vld [vmem:[#allocation2 + $0x488] sm:$0xff]
    %v546 = vld [vmem:[#allocation2 + $0x490] sm:$0xff]
    %v547 = vld [vmem:[#allocation2 + $0x498] sm:$0xff]
    %v548 = vld [vmem:[#allocation2 + $0x4a0] sm:$0xff]
    %v549 = vld [vmem:[#allocation2 + $0x4a8] sm:$0xff]
    %v550 = vld [vmem:[#allocation2 + $0x4b0] sm:$0xff]
    %v551 = vld [vmem:[#allocation2 + $0x4b8] sm:$0xff]
    %v552 = vld [vmem:[#allocation2 + $0x4c0] sm:$0xff]
    %v553 = vld [vmem:[#allocation2 + $0x4c8] sm:$0xff]
    %v554 = vld [vmem:[#allocation2 + $0x4d0] sm:$0xff]
    %v555 = vld [vmem:[#allocation2 + $0x4d8] sm:$0xff]
    %v556 = vld [vmem:[#allocation2 + $0x4e0] sm:$0xff]
    %v557 = vld [vmem:[#allocation2 + $0x4e8] sm:$0xff]
    %v558 = vld [vmem:[#allocation2 + $0x4f0] sm:$0xff]
    %v559 = vld [vmem:[#allocation2 + $0x4f8] sm:$0xff]
    %v560 = vld [vmem:[#allocation2 + $0x500] sm:$0xff]
    %v561 = vld [vmem:[#allocation2 + $0x508] sm:$0xff]
    %v562 = vld [vmem:[#allocation2 + $0x510] sm:$0xff]
    %v563 = vld [vmem:[#allocation2 + $0x518] sm:$0xff]
    %v564 = vld [vmem:[#allocation2 + $0x520] sm:$0xff]
    %v565 = vld [vmem:[#allocation2 + $0x528] sm:$0xff]
    %v566 = vld [vmem:[#allocation2 + $0x530] sm:$0xff]
    %v567 = vld [vmem:[#allocation2 + $0x538] sm:$0xff]
    %v568 = vld [vmem:[#allocation2 + $0x540] sm:$0xff]
    %v569 = vld [vmem:[#allocation2 + $0x548] sm:$0xff]
    %v570 = vld [vmem:[#allocation2 + $0x550] sm:$0xff]
    %v571 = vld [vmem:[#allocation2 + $0x558] sm:$0xff]
    %v572 = vld [vmem:[#allocation2 + $0x560] sm:$0xff]
    %v573 = vld [vmem:[#allocation2 + $0x568] sm:$0xff]
    %v574 = vld [vmem:[#allocation2 + $0x570] sm:$0xff]
    %v575 = vld [vmem:[#allocation2 + $0x578] sm:$0xff]
    %v576 = vld [vmem:[#allocation2 + $0x580] sm:$0xff]
    %v577 = vld [vmem:[#allocation2 + $0x588] sm:$0xff]
    %v578 = vld [vmem:[#allocation2 + $0x590] sm:$0xff]
    %v579 = vld [vmem:[#allocation2 + $0x598] sm:$0xff]
    %v580 = vld [vmem:[#allocation2 + $0x5a0] sm:$0xff]
    %v581 = vld [vmem:[#allocation2 + $0x5a8] sm:$0xff]
    %v582 = vld [vmem:[#allocation2 + $0x5b0] sm:$0xff]
    %v583 = vld [vmem:[#allocation2 + $0x5b8] sm:$0xff]
    %v584 = vld [vmem:[#allocation2 + $0x5c0] sm:$0xff]
    %v585 = vld [vmem:[#allocation2 + $0x5c8] sm:$0xff]
    %v586 = vld [vmem:[#allocation2 + $0x5d0] sm:$0xff]
    %v587 = vld [vmem:[#allocation2 + $0x5d8] sm:$0xff]
    %v588 = vld [vmem:[#allocation2 + $0x5e0] sm:$0xff]
    %v589 = vld [vmem:[#allocation2 + $0x5e8] sm:$0xff]
    %v590 = vld [vmem:[#allocation2 + $0x5f0] sm:$0xff]
    %v591 = vld [vmem:[#allocation2 + $0x5f8] sm:$0xff]
    %v592 = vpack.c.bf16 %v392, %v392
    %v593 = vpack.c.bf16 %v393, %v393
    %v594 = vpack.c.bf16 %v394, %v394
    %v595 = vpack.c.bf16 %v395, %v395
    %v596 = vpack.c.bf16 %v396, %v396
    %v597 = vpack.c.bf16 %v397, %v397
    %v598 = vpack.c.bf16 %v398, %v398
    %v599 = vpack.c.bf16 %v399, %v399
    %v728 = vunpack.c.l.b16 %v400
    %v729 = vunpack.c.h.b16 %v400
    %v730 = vunpack.c.l.b16 %v401
    %v731 = vunpack.c.l.b16 %v403
    %v732 = vunpack.c.h.b16 %v403
    %v733 = vunpack.c.l.b16 %v404
    %v734 = vunpack.c.l.b16 %v406
    %v735 = vunpack.c.h.b16 %v406
    %v736 = vunpack.c.l.b16 %v407
    %v737 = vunpack.c.l.b16 %v409
    %v738 = vunpack.c.h.b16 %v409
    %v739 = vunpack.c.l.b16 %v410
    %v740 = vunpack.c.l.b16 %v412
    %v741 = vunpack.c.h.b16 %v412
    %v742 = vunpack.c.l.b16 %v413
    %v743 = vunpack.c.l.b16 %v415
    %v744 = vunpack.c.h.b16 %v415
    %v745 = vunpack.c.l.b16 %v416
    %v746 = vunpack.c.l.b16 %v418
    %v747 = vunpack.c.h.b16 %v418
    %v748 = vunpack.c.l.b16 %v419
    %v749 = vunpack.c.l.b16 %v421
    %v750 = vunpack.c.h.b16 %v421
    %v751 = vunpack.c.l.b16 %v422
    %v752 = vunpack.c.l.b16 %v424
    %v753 = vunpack.c.h.b16 %v424
    %v754 = vunpack.c.l.b16 %v425
    %v755 = vunpack.c.l.b16 %v427
    %v756 = vunpack.c.h.b16 %v427
    %v757 = vunpack.c.l.b16 %v428
    %v758 = vunpack.c.l.b16 %v430
    %v759 = vunpack.c.h.b16 %v430
    %v760 = vunpack.c.l.b16 %v431
    %v761 = vunpack.c.l.b16 %v433
    %v762 = vunpack.c.h.b16 %v433
    %v763 = vunpack.c.l.b16 %v434
    %v764 = vunpack.c.l.b16 %v436
    %v765 = vunpack.c.h.b16 %v436
    %v766 = vunpack.c.l.b16 %v437
    %v767 = vunpack.c.l.b16 %v439
    %v768 = vunpack.c.h.b16 %v439
    %v769 = vunpack.c.l.b16 %v440
    %v770 = vunpack.c.l.b16 %v442
    %v771 = vunpack.c.h.b16 %v442
    %v772 = vunpack.c.l.b16 %v443
    %v773 = vunpack.c.l.b16 %v445
    %v774 = vunpack.c.h.b16 %v445
    %v775 = vunpack.c.l.b16 %v446
    %v776 = vunpack.c.l.b16 %v448
    %v777 = vunpack.c.h.b16 %v448
    %v778 = vunpack.c.l.b16 %v449
    %v779 = vunpack.c.l.b16 %v451
    %v780 = vunpack.c.h.b16 %v451
    %v781 = vunpack.c.l.b16 %v452
    %v782 = vunpack.c.l.b16 %v454
    %v783 = vunpack.c.h.b16 %v454
    %v784 = vunpack.c.l.b16 %v455
    %v785 = vunpack.c.l.b16 %v457
    %v786 = vunpack.c.h.b16 %v457
    %v787 = vunpack.c.l.b16 %v458
    %v788 = vunpack.c.l.b16 %v460
    %v789 = vunpack.c.h.b16 %v460
    %v790 = vunpack.c.l.b16 %v461
    %v791 = vunpack.c.l.b16 %v463
    %v792 = vunpack.c.h.b16 %v463
    %v793 = vunpack.c.l.b16 %v464
    %v794 = vunpack.c.l.b16 %v466
    %v795 = vunpack.c.h.b16 %v466
    %v796 = vunpack.c.l.b16 %v467
    %v797 = vunpack.c.l.b16 %v469
    %v798 = vunpack.c.h.b16 %v469
    %v799 = vunpack.c.l.b16 %v470
    %v800 = vunpack.c.l.b16 %v472
    %v801 = vunpack.c.h.b16 %v472
    %v802 = vunpack.c.l.b16 %v473
    %v803 = vunpack.c.l.b16 %v475
    %v804 = vunpack.c.h.b16 %v475
    %v805 = vunpack.c.l.b16 %v476
    %v806 = vunpack.c.l.b16 %v478
    %v807 = vunpack.c.h.b16 %v478
    %v808 = vunpack.c.l.b16 %v479
    %v809 = vunpack.c.l.b16 %v481
    %v810 = vunpack.c.h.b16 %v481
    %v811 = vunpack.c.l.b16 %v482
    %v812 = vunpack.c.l.b16 %v484
    %v813 = vunpack.c.h.b16 %v484
    %v814 = vunpack.c.l.b16 %v485
    %v815 = vunpack.c.l.b16 %v487
    %v816 = vunpack.c.h.b16 %v487
    %v817 = vunpack.c.l.b16 %v488
    %v818 = vunpack.c.l.b16 %v490
    %v819 = vunpack.c.h.b16 %v490
    %v820 = vunpack.c.l.b16 %v491
    %v821 = vunpack.c.l.b16 %v493
    %v822 = vunpack.c.h.b16 %v493
    %v823 = vunpack.c.l.b16 %v494
    %v824 = vunpack.c.l.b16 %v496
    %v825 = vunpack.c.h.b16 %v496
    %v826 = vunpack.c.l.b16 %v497
    %v827 = vunpack.c.l.b16 %v499
    %v828 = vunpack.c.h.b16 %v499
    %v829 = vunpack.c.l.b16 %v500
    %v830 = vunpack.c.l.b16 %v502
    %v831 = vunpack.c.h.b16 %v502
    %v832 = vunpack.c.l.b16 %v503
    %v833 = vunpack.c.l.b16 %v505
    %v834 = vunpack.c.h.b16 %v505
    %v835 = vunpack.c.l.b16 %v506
    %v836 = vunpack.c.l.b16 %v508
    %v837 = vunpack.c.h.b16 %v508
    %v838 = vunpack.c.l.b16 %v509
    %v839 = vunpack.c.l.b16 %v511
    %v840 = vunpack.c.h.b16 %v511
    %v841 = vunpack.c.l.b16 %v512
    %v842 = vunpack.c.l.b16 %v514
    %v843 = vunpack.c.h.b16 %v514
    %v844 = vunpack.c.l.b16 %v515
    %v845 = vunpack.c.l.b16 %v517
    %v846 = vunpack.c.h.b16 %v517
    %v847 = vunpack.c.l.b16 %v518
    %v848 = vunpack.c.l.b16 %v520
    %v849 = vunpack.c.h.b16 %v520
    %v850 = vunpack.c.l.b16 %v521
    %v851 = vunpack.c.l.b16 %v523
    %v852 = vunpack.c.h.b16 %v523
    %v853 = vunpack.c.l.b16 %v524
    %v854 = vunpack.c.l.b16 %v526
    %v855 = vunpack.c.h.b16 %v526
    %v856 = vunpack.c.l.b16 %v527
    %v857 = vunpack.c.l.b16 %v529
    %v858 = vunpack.c.h.b16 %v529
    %v859 = vunpack.c.l.b16 %v530
    %v860 = vunpack.c.l.b16 %v532
    %v861 = vunpack.c.h.b16 %v532
    %v862 = vunpack.c.l.b16 %v533
    %v863 = vunpack.c.l.b16 %v535
    %v864 = vunpack.c.h.b16 %v535
    %v865 = vunpack.c.l.b16 %v536
    %v866 = vunpack.c.l.b16 %v538
    %v867 = vunpack.c.h.b16 %v538
    %v868 = vunpack.c.l.b16 %v539
    %v869 = vunpack.c.l.b16 %v541
    %v870 = vunpack.c.h.b16 %v541
    %v871 = vunpack.c.l.b16 %v542
    %v872 = vunpack.c.l.b16 %v544
    %v873 = vunpack.c.h.b16 %v544
    %v874 = vunpack.c.l.b16 %v545
    %v875 = vunpack.c.l.b16 %v547
    %v876 = vunpack.c.h.b16 %v547
    %v877 = vunpack.c.l.b16 %v548
    %v878 = vunpack.c.l.b16 %v550
    %v879 = vunpack.c.h.b16 %v550
    %v880 = vunpack.c.l.b16 %v551
    %v881 = vunpack.c.l.b16 %v553
    %v882 = vunpack.c.h.b16 %v553
    %v883 = vunpack.c.l.b16 %v554
    %v884 = vunpack.c.l.b16 %v556
    %v885 = vunpack.c.h.b16 %v556
    %v886 = vunpack.c.l.b16 %v557
    %v887 = vunpack.c.l.b16 %v559
    %v888 = vunpack.c.h.b16 %v559
    %v889 = vunpack.c.l.b16 %v560
    %v890 = vunpack.c.l.b16 %v562
    %v891 = vunpack.c.h.b16 %v562
    %v892 = vunpack.c.l.b16 %v563
    %v893 = vunpack.c.l.b16 %v565
    %v894 = vunpack.c.h.b16 %v565
    %v895 = vunpack.c.l.b16 %v566
    %v896 = vunpack.c.l.b16 %v568
    %v897 = vunpack.c.h.b16 %v568
    %v898 = vunpack.c.l.b16 %v569
    %v899 = vunpack.c.l.b16 %v571
    %v900 = vunpack.c.h.b16 %v571
    %v901 = vunpack.c.l.b16 %v572
    %v902 = vunpack.c.l.b16 %v574
    %v903 = vunpack.c.h.b16 %v574
    %v904 = vunpack.c.l.b16 %v575
    %v905 = vunpack.c.l.b16 %v577
    %v906 = vunpack.c.h.b16 %v577
    %v907 = vunpack.c.l.b16 %v578
    %v908 = vunpack.c.l.b16 %v580
    %v909 = vunpack.c.h.b16 %v580
    %v910 = vunpack.c.l.b16 %v581
    %v911 = vunpack.c.l.b16 %v583
    %v912 = vunpack.c.h.b16 %v583
    %v913 = vunpack.c.l.b16 %v584
    %v914 = vunpack.c.l.b16 %v586
    %v915 = vunpack.c.h.b16 %v586
    %v916 = vunpack.c.l.b16 %v587
    %v917 = vunpack.c.l.b16 %v589
    %v918 = vunpack.c.h.b16 %v589
    %v919 = vunpack.c.l.b16 %v590
    %v920 = vpack.c.b16 %v731, %v728
    %v921 = vpack.c.b16 %v732, %v729
    %v922 = vpack.c.b16 %v733, %v730
    %v923 = vpack.c.b16 %v737, %v734
    %v924 = vpack.c.b16 %v738, %v735
    %v925 = vpack.c.b16 %v739, %v736
    %v926 = vpack.c.b16 %v743, %v740
    %v927 = vpack.c.b16 %v744, %v741
    %v928 = vpack.c.b16 %v745, %v742
    %v929 = vpack.c.b16 %v749, %v746
    %v930 = vpack.c.b16 %v750, %v747
    %v931 = vpack.c.b16 %v751, %v748
    %v932 = vpack.c.b16 %v755, %v752
    %v933 = vpack.c.b16 %v756, %v753
    %v934 = vpack.c.b16 %v757, %v754
    %v935 = vpack.c.b16 %v761, %v758
    %v936 = vpack.c.b16 %v762, %v759
    %v937 = vpack.c.b16 %v763, %v760
    %v938 = vpack.c.b16 %v767, %v764
    %v939 = vpack.c.b16 %v768, %v765
    %v940 = vpack.c.b16 %v769, %v766
    %v941 = vpack.c.b16 %v773, %v770
    %v942 = vpack.c.b16 %v774, %v771
    %v943 = vpack.c.b16 %v775, %v772
    %v944 = vpack.c.b16 %v779, %v776
    %v945 = vpack.c.b16 %v780, %v777
    %v946 = vpack.c.b16 %v781, %v778
    %v947 = vpack.c.b16 %v785, %v782
    %v948 = vpack.c.b16 %v786, %v783
    %v949 = vpack.c.b16 %v787, %v784
    %v950 = vpack.c.b16 %v791, %v788
    %v951 = vpack.c.b16 %v792, %v789
    %v952 = vpack.c.b16 %v793, %v790
    %v953 = vpack.c.b16 %v797, %v794
    %v954 = vpack.c.b16 %v798, %v795
    %v955 = vpack.c.b16 %v799, %v796
    %v956 = vpack.c.b16 %v803, %v800
    %v957 = vpack.c.b16 %v804, %v801
    %v958 = vpack.c.b16 %v805, %v802
    %v959 = vpack.c.b16 %v809, %v806
    %v960 = vpack.c.b16 %v810, %v807
    %v961 = vpack.c.b16 %v811, %v808
    %v962 = vpack.c.b16 %v815, %v812
    %v963 = vpack.c.b16 %v816, %v813
    %v964 = vpack.c.b16 %v817, %v814
    %v965 = vpack.c.b16 %v821, %v818
    %v966 = vpack.c.b16 %v822, %v819
    %v967 = vpack.c.b16 %v823, %v820
    %v968 = vpack.c.b16 %v827, %v824
    %v969 = vpack.c.b16 %v828, %v825
    %v970 = vpack.c.b16 %v829, %v826
    %v971 = vpack.c.b16 %v833, %v830
    %v972 = vpack.c.b16 %v834, %v831
    %v973 = vpack.c.b16 %v835, %v832
    %v974 = vpack.c.b16 %v839, %v836
    %v975 = vpack.c.b16 %v840, %v837
    %v976 = vpack.c.b16 %v841, %v838
    %v977 = vpack.c.b16 %v845, %v842
    %v978 = vpack.c.b16 %v846, %v843
    %v979 = vpack.c.b16 %v847, %v844
    %v980 = vpack.c.b16 %v851, %v848
    %v981 = vpack.c.b16 %v852, %v849
    %v982 = vpack.c.b16 %v853, %v850
    %v983 = vpack.c.b16 %v857, %v854
    %v984 = vpack.c.b16 %v858, %v855
    %v985 = vpack.c.b16 %v859, %v856
    %v986 = vpack.c.b16 %v863, %v860
    %v987 = vpack.c.b16 %v864, %v861
    %v988 = vpack.c.b16 %v865, %v862
    %v989 = vpack.c.b16 %v869, %v866
    %v990 = vpack.c.b16 %v870, %v867
    %v991 = vpack.c.b16 %v871, %v868
    %v992 = vpack.c.b16 %v875, %v872
    %v993 = vpack.c.b16 %v876, %v873
    %v994 = vpack.c.b16 %v877, %v874
    %v995 = vpack.c.b16 %v881, %v878
    %v996 = vpack.c.b16 %v882, %v879
    %v997 = vpack.c.b16 %v883, %v880
    %v998 = vpack.c.b16 %v887, %v884
    %v999 = vpack.c.b16 %v888, %v885
    %v1000 = vpack.c.b16 %v889, %v886
    %v1001 = vpack.c.b16 %v893, %v890
    %v1002 = vpack.c.b16 %v894, %v891
    %v1003 = vpack.c.b16 %v895, %v892
    %v1004 = vpack.c.b16 %v899, %v896
    %v1005 = vpack.c.b16 %v900, %v897
    %v1006 = vpack.c.b16 %v901, %v898
    %v1007 = vpack.c.b16 %v905, %v902
    %v1008 = vpack.c.b16 %v906, %v903
    %v1009 = vpack.c.b16 %v907, %v904
    %v1010 = vpack.c.b16 %v911, %v908
    %v1011 = vpack.c.b16 %v912, %v909
    %v1012 = vpack.c.b16 %v913, %v910
    %v1013 = vpack.c.b16 %v917, %v914
    %v1014 = vpack.c.b16 %v918, %v915
    %v1015 = vpack.c.b16 %v919, %v916
    %1112 = vmatpush.bf16.msra.mxu0 %v941
    %1113 = vmatpush.bf16.msra.mxu0 %v938
    %1114 = vmatpush.bf16.msra.mxu0 %v935
    %1115 = vmatpush.bf16.msra.mxu0 %v932
    %1116 = vmatpush.bf16.msra.mxu0 %v929
    %1117 = vmatpush.bf16.msra.mxu0 %v926
    %1118 = vmatpush.bf16.msra.mxu0 %v923
    %1119 = vmatpush.bf16.msra.mxu0 %v920
    %1120 = vmatmul.bf16.gmra.mxu0 %v592
    %v1121 = vpop.f32.mrf.mxu0
    %v1122 = vadd.f32 0.0, %v1121
    %v1123 = vpop.f32.mrf.mxu0
    %1124 = vdwg.mxu0
    %1125 = vmatpush.bf16.msra.mxu0 %v965
    %1126 = vmatpush.bf16.msra.mxu0 %v962
    %1127 = vmatpush.bf16.msra.mxu0 %v959
    %1128 = vmatpush.bf16.msra.mxu0 %v956
    %1129 = vmatpush.bf16.msra.mxu0 %v953
    %1130 = vmatpush.bf16.msra.mxu0 %v950
    %1131 = vmatpush.bf16.msra.mxu0 %v947
    %1132 = vmatpush.bf16.msra.mxu0 %v944
    %1133 = vmatmul.bf16.gmra.mxu0 %v593
    %v1134 = vpop.f32.mrf.mxu0
    %v1135 = vadd.f32 %v1122, %v1134
    %v1136 = vpop.f32.mrf.mxu0
    %1137 = vdwg.mxu0
    %1138 = vmatpush.bf16.msra.mxu0 %v989
    %1139 = vmatpush.bf16.msra.mxu0 %v986
    %1140 = vmatpush.bf16.msra.mxu0 %v983
    %1141 = vmatpush.bf16.msra.mxu0 %v980
    %1142 = vmatpush.bf16.msra.mxu0 %v977
    %1143 = vmatpush.bf16.msra.mxu0 %v974
    %1144 = vmatpush.bf16.msra.mxu0 %v971
    %1145 = vmatpush.bf16.msra.mxu0 %v968
    %1146 = vmatmul.bf16.gmra.mxu0 %v594
    %v1147 = vpop.f32.mrf.mxu0
    %v1148 = vadd.f32 %v1135, %v1147
    %v1149 = vpop.f32.mrf.mxu0
    %1150 = vdwg.mxu0
    %1151 = vmatpush.bf16.msra.mxu0 %v1013
    %1152 = vmatpush.bf16.msra.mxu0 %v1010
    %1153 = vmatpush.bf16.msra.mxu0 %v1007
    %1154 = vmatpush.bf16.msra.mxu0 %v1004
    %1155 = vmatpush.bf16.msra.mxu0 %v1001
    %1156 = vmatpush.bf16.msra.mxu0 %v998
    %1157 = vmatpush.bf16.msra.mxu0 %v995
    %1158 = vmatpush.bf16.msra.mxu0 %v992
    %1159 = vmatmul.bf16.gmra.mxu0 %v595
    %v1160 = vpop.f32.mrf.mxu0
    %v1161 = vadd.f32 %v1148, %v1160
    %v1162 = vpop.f32.mrf.mxu0
    %1163 = vdwg.mxu0
    %1164 = vmatpush.bf16.msra.mxu0 %v942
    %1165 = vmatpush.bf16.msra.mxu0 %v939
    %1166 = vmatpush.bf16.msra.mxu0 %v936
    %1167 = vmatpush.bf16.msra.mxu0 %v933
    %1168 = vmatpush.bf16.msra.mxu0 %v930
    %1169 = vmatpush.bf16.msra.mxu0 %v927
    %1170 = vmatpush.bf16.msra.mxu0 %v924
    %1171 = vmatpush.bf16.msra.mxu0 %v921
    %1172 = vmatmul.bf16.gmra.mxu0 %v592
    %v1173 = vpop.f32.mrf.mxu0
    %v1174 = vadd.f32 0.0, %v1173
    %v1175 = vpop.f32.mrf.mxu0
    %1176 = vdwg.mxu0
    %1177 = vmatpush.bf16.msra.mxu0 %v966
    %1178 = vmatpush.bf16.msra.mxu0 %v963
    %1179 = vmatpush.bf16.msra.mxu0 %v960
    %1180 = vmatpush.bf16.msra.mxu0 %v957
    %1181 = vmatpush.bf16.msra.mxu0 %v954
    %1182 = vmatpush.bf16.msra.mxu0 %v951
    %1183 = vmatpush.bf16.msra.mxu0 %v948
    %1184 = vmatpush.bf16.msra.mxu0 %v945
    %1185 = vmatmul.bf16.gmra.mxu0 %v593
    %v1186 = vpop.f32.mrf.mxu0
    %v1187 = vadd.f32 %v1174, %v1186
    %v1188 = vpop.f32.mrf.mxu0
    %1189 = vdwg.mxu0
    %1190 = vmatpush.bf16.msra.mxu0 %v990
    %1191 = vmatpush.bf16.msra.mxu0 %v987
    %1192 = vmatpush.bf16.msra.mxu0 %v984
    %1193 = vmatpush.bf16.msra.mxu0 %v981
    %1194 = vmatpush.bf16.msra.mxu0 %v978
    %1195 = vmatpush.bf16.msra.mxu0 %v975
    %1196 = vmatpush.bf16.msra.mxu0 %v972
    %1197 = vmatpush.bf16.msra.mxu0 %v969
    %1198 = vmatmul.bf16.gmra.mxu0 %v594
    %v1199 = vpop.f32.mrf.mxu0
    %v1200 = vadd.f32 %v1187, %v1199
    %v1201 = vpop.f32.mrf.mxu0
    %1202 = vdwg.mxu0
    %1203 = vmatpush.bf16.msra.mxu0 %v1014
    %1204 = vmatpush.bf16.msra.mxu0 %v1011
    %1205 = vmatpush.bf16.msra.mxu0 %v1008
    %1206 = vmatpush.bf16.msra.mxu0 %v1005
    %1207 = vmatpush.bf16.msra.mxu0 %v1002
    %1208 = vmatpush.bf16.msra.mxu0 %v999
    %1209 = vmatpush.bf16.msra.mxu0 %v996
    %1210 = vmatpush.bf16.msra.mxu0 %v993
    %1211 = vmatmul.bf16.gmra.mxu0 %v595
    %v1212 = vpop.f32.mrf.mxu0
    %v1213 = vadd.f32 %v1200, %v1212
    %v1214 = vpop.f32.mrf.mxu0
    %1215 = vdwg.mxu0
    %1216 = vmatpush.bf16.msra.mxu0 %v943
    %1217 = vmatpush.bf16.msra.mxu0 %v940
    %1218 = vmatpush.bf16.msra.mxu0 %v937
    %1219 = vmatpush.bf16.msra.mxu0 %v934
    %1220 = vmatpush.bf16.msra.mxu0 %v931
    %1221 = vmatpush.bf16.msra.mxu0 %v928
    %1222 = vmatpush.bf16.msra.mxu0 %v925
    %1223 = vmatpush.bf16.msra.mxu0 %v922
    %1224 = vmatmul.bf16.gmra.mxu0 %v592
    %v1225 = vpop.f32.mrf.mxu0
    %v1226 = vadd.f32 0.0, %v1225
    %v1227 = vpop.f32.mrf.mxu0
    %1228 = vdwg.mxu0
    %1229 = vmatpush.bf16.msra.mxu0 %v967
    %1230 = vmatpush.bf16.msra.mxu0 %v964
    %1231 = vmatpush.bf16.msra.mxu0 %v961
    %1232 = vmatpush.bf16.msra.mxu0 %v958
    %1233 = vmatpush.bf16.msra.mxu0 %v955
    %1234 = vmatpush.bf16.msra.mxu0 %v952
    %1235 = vmatpush.bf16.msra.mxu0 %v949
    %1236 = vmatpush.bf16.msra.mxu0 %v946
    %1237 = vmatmul.bf16.gmra.mxu0 %v593
    %v1238 = vpop.f32.mrf.mxu0
    %v1239 = vadd.f32 %v1226, %v1238
    %v1240 = vpop.f32.mrf.mxu0
    %1241 = vdwg.mxu0
    %1242 = vmatpush.bf16.msra.mxu0 %v991
    %1243 = vmatpush.bf16.msra.mxu0 %v988
    %1244 = vmatpush.bf16.msra.mxu0 %v985
    %1245 = vmatpush.bf16.msra.mxu0 %v982
    %1246 = vmatpush.bf16.msra.mxu0 %v979
    %1247 = vmatpush.bf16.msra.mxu0 %v976
    %1248 = vmatpush.bf16.msra.mxu0 %v973
    %1249 = vmatpush.bf16.msra.mxu0 %v970
    %1250 = vmatmul.bf16.gmra.mxu0 %v594
    %v1251 = vpop.f32.mrf.mxu0
    %v1252 = vadd.f32 %v1239, %v1251
    %v1253 = vpop.f32.mrf.mxu0
    %1254 = vdwg.mxu0
    %1255 = vmatpush.bf16.msra.mxu0 %v1015
    %1256 = vmatpush.bf16.msra.mxu0 %v1012
    %1257 = vmatpush.bf16.msra.mxu0 %v1009
    %1258 = vmatpush.bf16.msra.mxu0 %v1006
    %1259 = vmatpush.bf16.msra.mxu0 %v1003
    %1260 = vmatpush.bf16.msra.mxu0 %v1000
    %1261 = vmatpush.bf16.msra.mxu0 %v997
    %1262 = vmatpush.bf16.msra.mxu0 %v994
    %1263 = vmatmul.bf16.gmra.mxu0 %v595
    %v1264 = vpop.f32.mrf.mxu0
    %v1265 = vadd.f32 %v1252, %v1264
    %v1266 = vpop.f32.mrf.mxu0
    %1267 = vdwg.mxu0
    %v1332 = vunpack.c.h.b16 %v401
    %v1333 = vunpack.c.l.b16 %v402
    %v1334 = vunpack.c.h.b16 %v402
    %v1335 = vunpack.c.h.b16 %v404
    %v1336 = vunpack.c.l.b16 %v405
    %v1337 = vunpack.c.h.b16 %v405
    %v1338 = vunpack.c.h.b16 %v407
    %v1339 = vunpack.c.l.b16 %v408
    %v1340 = vunpack.c.h.b16 %v408
    %v1341 = vunpack.c.h.b16 %v410
    %v1342 = vunpack.c.l.b16 %v411
    %v1343 = vunpack.c.h.b16 %v411
    %v1344 = vunpack.c.h.b16 %v413
    %v1345 = vunpack.c.l.b16 %v414
    %v1346 = vunpack.c.h.b16 %v414
    %v1347 = vunpack.c.h.b16 %v416
    %v1348 = vunpack.c.l.b16 %v417
    %v1349 = vunpack.c.h.b16 %v417
    %v1350 = vunpack.c.h.b16 %v419
    %v1351 = vunpack.c.l.b16 %v420
    %v1352 = vunpack.c.h.b16 %v420
    %v1353 = vunpack.c.h.b16 %v422
    %v1354 = vunpack.c.l.b16 %v423
    %v1355 = vunpack.c.h.b16 %v423
    %v1356 = vunpack.c.h.b16 %v425
    %v1357 = vunpack.c.l.b16 %v426
    %v1358 = vunpack.c.h.b16 %v426
    %v1359 = vunpack.c.h.b16 %v428
    %v1360 = vunpack.c.l.b16 %v429
    %v1361 = vunpack.c.h.b16 %v429
    %v1362 = vunpack.c.h.b16 %v431
    %v1363 = vunpack.c.l.b16 %v432
    %v1364 = vunpack.c.h.b16 %v432
    %v1365 = vunpack.c.h.b16 %v434
    %v1366 = vunpack.c.l.b16 %v435
    %v1367 = vunpack.c.h.b16 %v435
    %v1368 = vunpack.c.h.b16 %v437
    %v1369 = vunpack.c.l.b16 %v438
    %v1370 = vunpack.c.h.b16 %v438
    %v1371 = vunpack.c.h.b16 %v440
    %v1372 = vunpack.c.l.b16 %v441
    %v1373 = vunpack.c.h.b16 %v441
    %v1374 = vunpack.c.h.b16 %v443
    %v1375 = vunpack.c.l.b16 %v444
    %v1376 = vunpack.c.h.b16 %v444
    %v1377 = vunpack.c.h.b16 %v446
    %v1378 = vunpack.c.l.b16 %v447
    %v1379 = vunpack.c.h.b16 %v447
    %v1380 = vunpack.c.h.b16 %v449
    %v1381 = vunpack.c.l.b16 %v450
    %v1382 = vunpack.c.h.b16 %v450
    %v1383 = vunpack.c.h.b16 %v452
    %v1384 = vunpack.c.l.b16 %v453
    %v1385 = vunpack.c.h.b16 %v453
    %v1386 = vunpack.c.h.b16 %v455
    %v1387 = vunpack.c.l.b16 %v456
    %v1388 = vunpack.c.h.b16 %v456
    %v1389 = vunpack.c.h.b16 %v458
    %v1390 = vunpack.c.l.b16 %v459
    %v1391 = vunpack.c.h.b16 %v459
    %v1392 = vunpack.c.h.b16 %v461
    %v1393 = vunpack.c.l.b16 %v462
    %v1394 = vunpack.c.h.b16 %v462
    %v1395 = vunpack.c.h.b16 %v464
    %v1396 = vunpack.c.l.b16 %v465
    %v1397 = vunpack.c.h.b16 %v465
    %v1398 = vunpack.c.h.b16 %v467
    %v1399 = vunpack.c.l.b16 %v468
    %v1400 = vunpack.c.h.b16 %v468
    %v1401 = vunpack.c.h.b16 %v470
    %v1402 = vunpack.c.l.b16 %v471
    %v1403 = vunpack.c.h.b16 %v471
    %v1404 = vunpack.c.h.b16 %v473
    %v1405 = vunpack.c.l.b16 %v474
    %v1406 = vunpack.c.h.b16 %v474
    %v1407 = vunpack.c.h.b16 %v476
    %v1408 = vunpack.c.l.b16 %v477
    %v1409 = vunpack.c.h.b16 %v477
    %v1410 = vunpack.c.h.b16 %v479
    %v1411 = vunpack.c.l.b16 %v480
    %v1412 = vunpack.c.h.b16 %v480
    %v1413 = vunpack.c.h.b16 %v482
    %v1414 = vunpack.c.l.b16 %v483
    %v1415 = vunpack.c.h.b16 %v483
    %v1416 = vunpack.c.h.b16 %v485
    %v1417 = vunpack.c.l.b16 %v486
    %v1418 = vunpack.c.h.b16 %v486
    %v1419 = vunpack.c.h.b16 %v488
    %v1420 = vunpack.c.l.b16 %v489
    %v1421 = vunpack.c.h.b16 %v489
    %v1422 = vunpack.c.h.b16 %v491
    %v1423 = vunpack.c.l.b16 %v492
    %v1424 = vunpack.c.h.b16 %v492
    %v1425 = vunpack.c.h.b16 %v494
    %v1426 = vunpack.c.l.b16 %v495
    %v1427 = vunpack.c.h.b16 %v495
    %v1428 = vunpack.c.h.b16 %v497
    %v1429 = vunpack.c.l.b16 %v498
    %v1430 = vunpack.c.h.b16 %v498
    %v1431 = vunpack.c.h.b16 %v500
    %v1432 = vunpack.c.l.b16 %v501
    %v1433 = vunpack.c.h.b16 %v501
    %v1434 = vunpack.c.h.b16 %v503
    %v1435 = vunpack.c.l.b16 %v504
    %v1436 = vunpack.c.h.b16 %v504
    %v1437 = vunpack.c.h.b16 %v506
    %v1438 = vunpack.c.l.b16 %v507
    %v1439 = vunpack.c.h.b16 %v507
    %v1440 = vunpack.c.h.b16 %v509
    %v1441 = vunpack.c.l.b16 %v510
    %v1442 = vunpack.c.h.b16 %v510
    %v1443 = vunpack.c.h.b16 %v512
    %v1444 = vunpack.c.l.b16 %v513
    %v1445 = vunpack.c.h.b16 %v513
    %v1446 = vunpack.c.h.b16 %v515
    %v1447 = vunpack.c.l.b16 %v516
    %v1448 = vunpack.c.h.b16 %v516
    %v1449 = vunpack.c.h.b16 %v518
    %v1450 = vunpack.c.l.b16 %v519
    %v1451 = vunpack.c.h.b16 %v519
    %v1452 = vunpack.c.h.b16 %v521
    %v1453 = vunpack.c.l.b16 %v522
    %v1454 = vunpack.c.h.b16 %v522
    %v1455 = vunpack.c.h.b16 %v524
    %v1456 = vunpack.c.l.b16 %v525
    %v1457 = vunpack.c.h.b16 %v525
    %v1458 = vunpack.c.h.b16 %v527
    %v1459 = vunpack.c.l.b16 %v528
    %v1460 = vunpack.c.h.b16 %v528
    %v1461 = vunpack.c.h.b16 %v530
    %v1462 = vunpack.c.l.b16 %v531
    %v1463 = vunpack.c.h.b16 %v531
    %v1464 = vunpack.c.h.b16 %v533
    %v1465 = vunpack.c.l.b16 %v534
    %v1466 = vunpack.c.h.b16 %v534
    %v1467 = vunpack.c.h.b16 %v536
    %v1468 = vunpack.c.l.b16 %v537
    %v1469 = vunpack.c.h.b16 %v537
    %v1470 = vunpack.c.h.b16 %v539
    %v1471 = vunpack.c.l.b16 %v540
    %v1472 = vunpack.c.h.b16 %v540
    %v1473 = vunpack.c.h.b16 %v542
    %v1474 = vunpack.c.l.b16 %v543
    %v1475 = vunpack.c.h.b16 %v543
    %v1476 = vunpack.c.h.b16 %v545
    %v1477 = vunpack.c.l.b16 %v546
    %v1478 = vunpack.c.h.b16 %v546
    %v1479 = vunpack.c.h.b16 %v548
    %v1480 = vunpack.c.l.b16 %v549
    %v1481 = vunpack.c.h.b16 %v549
    %v1482 = vunpack.c.h.b16 %v551
    %v1483 = vunpack.c.l.b16 %v552
    %v1484 = vunpack.c.h.b16 %v552
    %v1485 = vunpack.c.h.b16 %v554
    %v1486 = vunpack.c.l.b16 %v555
    %v1487 = vunpack.c.h.b16 %v555
    %v1488 = vunpack.c.h.b16 %v557
    %v1489 = vunpack.c.l.b16 %v558
    %v1490 = vunpack.c.h.b16 %v558
    %v1491 = vunpack.c.h.b16 %v560
    %v1492 = vunpack.c.l.b16 %v561
    %v1493 = vunpack.c.h.b16 %v561
    %v1494 = vunpack.c.h.b16 %v563
    %v1495 = vunpack.c.l.b16 %v564
    %v1496 = vunpack.c.h.b16 %v564
    %v1497 = vunpack.c.h.b16 %v566
    %v1498 = vunpack.c.l.b16 %v567
    %v1499 = vunpack.c.h.b16 %v567
    %v1500 = vunpack.c.h.b16 %v569
    %v1501 = vunpack.c.l.b16 %v570
    %v1502 = vunpack.c.h.b16 %v570
    %v1503 = vunpack.c.h.b16 %v572
    %v1504 = vunpack.c.l.b16 %v573
    %v1505 = vunpack.c.h.b16 %v573
    %v1506 = vunpack.c.h.b16 %v575
    %v1507 = vunpack.c.l.b16 %v576
    %v1508 = vunpack.c.h.b16 %v576
    %v1509 = vunpack.c.h.b16 %v578
    %v1510 = vunpack.c.l.b16 %v579
    %v1511 = vunpack.c.h.b16 %v579
    %v1512 = vunpack.c.h.b16 %v581
    %v1513 = vunpack.c.l.b16 %v582
    %v1514 = vunpack.c.h.b16 %v582
    %v1515 = vunpack.c.h.b16 %v584
    %v1516 = vunpack.c.l.b16 %v585
    %v1517 = vunpack.c.h.b16 %v585
    %v1518 = vunpack.c.h.b16 %v587
    %v1519 = vunpack.c.l.b16 %v588
    %v1520 = vunpack.c.h.b16 %v588
    %v1521 = vunpack.c.h.b16 %v590
    %v1522 = vunpack.c.l.b16 %v591
    %v1523 = vunpack.c.h.b16 %v591
    %v1524 = vpack.c.b16 %v1335, %v1332
    %v1525 = vpack.c.b16 %v1336, %v1333
    %v1526 = vpack.c.b16 %v1337, %v1334
    %v1527 = vpack.c.b16 %v1341, %v1338
    %v1528 = vpack.c.b16 %v1342, %v1339
    %v1529 = vpack.c.b16 %v1343, %v1340
    %v1530 = vpack.c.b16 %v1347, %v1344
    %v1531 = vpack.c.b16 %v1348, %v1345
    %v1532 = vpack.c.b16 %v1349, %v1346
    %v1533 = vpack.c.b16 %v1353, %v1350
    %v1534 = vpack.c.b16 %v1354, %v1351
    %v1535 = vpack.c.b16 %v1355, %v1352
    %v1536 = vpack.c.b16 %v1359, %v1356
    %v1537 = vpack.c.b16 %v1360, %v1357
    %v1538 = vpack.c.b16 %v1361, %v1358
    %v1539 = vpack.c.b16 %v1365, %v1362
    %v1540 = vpack.c.b16 %v1366, %v1363
    %v1541 = vpack.c.b16 %v1367, %v1364
    %v1542 = vpack.c.b16 %v1371, %v1368
    %v1543 = vpack.c.b16 %v1372, %v1369
    %v1544 = vpack.c.b16 %v1373, %v1370
    %v1545 = vpack.c.b16 %v1377, %v1374
    %v1546 = vpack.c.b16 %v1378, %v1375
    %v1547 = vpack.c.b16 %v1379, %v1376
    %v1548 = vpack.c.b16 %v1383, %v1380
    %v1549 = vpack.c.b16 %v1384, %v1381
    %v1550 = vpack.c.b16 %v1385, %v1382
    %v1551 = vpack.c.b16 %v1389, %v1386
    %v1552 = vpack.c.b16 %v1390, %v1387
    %v1553 = vpack.c.b16 %v1391, %v1388
    %v1554 = vpack.c.b16 %v1395, %v1392
    %v1555 = vpack.c.b16 %v1396, %v1393
    %v1556 = vpack.c.b16 %v1397, %v1394
    %v1557 = vpack.c.b16 %v1401, %v1398
    %v1558 = vpack.c.b16 %v1402, %v1399
    %v1559 = vpack.c.b16 %v1403, %v1400
    %v1560 = vpack.c.b16 %v1407, %v1404
    %v1561 = vpack.c.b16 %v1408, %v1405
    %v1562 = vpack.c.b16 %v1409, %v1406
    %v1563 = vpack.c.b16 %v1413, %v1410
    %v1564 = vpack.c.b16 %v1414, %v1411
    %v1565 = vpack.c.b16 %v1415, %v1412
    %v1566 = vpack.c.b16 %v1419, %v1416
    %v1567 = vpack.c.b16 %v1420, %v1417
    %v1568 = vpack.c.b16 %v1421, %v1418
    %v1569 = vpack.c.b16 %v1425, %v1422
    %v1570 = vpack.c.b16 %v1426, %v1423
    %v1571 = vpack.c.b16 %v1427, %v1424
    %v1572 = vpack.c.b16 %v1431, %v1428
    %v1573 = vpack.c.b16 %v1432, %v1429
    %v1574 = vpack.c.b16 %v1433, %v1430
    %v1575 = vpack.c.b16 %v1437, %v1434
    %v1576 = vpack.c.b16 %v1438, %v1435
    %v1577 = vpack.c.b16 %v1439, %v1436
    %v1578 = vpack.c.b16 %v1443, %v1440
    %v1579 = vpack.c.b16 %v1444, %v1441
    %v1580 = vpack.c.b16 %v1445, %v1442
    %v1581 = vpack.c.b16 %v1449, %v1446
    %v1582 = vpack.c.b16 %v1450, %v1447
    %v1583 = vpack.c.b16 %v1451, %v1448
    %v1584 = vpack.c.b16 %v1455, %v1452
    %v1585 = vpack.c.b16 %v1456, %v1453
    %v1586 = vpack.c.b16 %v1457, %v1454
    %v1587 = vpack.c.b16 %v1461, %v1458
    %v1588 = vpack.c.b16 %v1462, %v1459
    %v1589 = vpack.c.b16 %v1463, %v1460
    %v1590 = vpack.c.b16 %v1467, %v1464
    %v1591 = vpack.c.b16 %v1468, %v1465
    %v1592 = vpack.c.b16 %v1469, %v1466
    %v1593 = vpack.c.b16 %v1473, %v1470
    %v1594 = vpack.c.b16 %v1474, %v1471
    %v1595 = vpack.c.b16 %v1475, %v1472
    %v1596 = vpack.c.b16 %v1479, %v1476
    %v1597 = vpack.c.b16 %v1480, %v1477
    %v1598 = vpack.c.b16 %v1481, %v1478
    %v1599 = vpack.c.b16 %v1485, %v1482
    %v1600 = vpack.c.b16 %v1486, %v1483
    %v1601 = vpack.c.b16 %v1487, %v1484
    %v1602 = vpack.c.b16 %v1491, %v1488
    %v1603 = vpack.c.b16 %v1492, %v1489
    %v1604 = vpack.c.b16 %v1493, %v1490
    %v1605 = vpack.c.b16 %v1497, %v1494
    %v1606 = vpack.c.b16 %v1498, %v1495
    %v1607 = vpack.c.b16 %v1499, %v1496
    %v1608 = vpack.c.b16 %v1503, %v1500
    %v1609 = vpack.c.b16 %v1504, %v1501
    %v1610 = vpack.c.b16 %v1505, %v1502
    %v1611 = vpack.c.b16 %v1509, %v1506
    %v1612 = vpack.c.b16 %v1510, %v1507
    %v1613 = vpack.c.b16 %v1511, %v1508
    %v1614 = vpack.c.b16 %v1515, %v1512
    %v1615 = vpack.c.b16 %v1516, %v1513
    %v1616 = vpack.c.b16 %v1517, %v1514
    %v1617 = vpack.c.b16 %v1521, %v1518
    %v1618 = vpack.c.b16 %v1522, %v1519
    %v1619 = vpack.c.b16 %v1523, %v1520
    %1716 = vmatpush.bf16.msra.mxu0 %v1545
    %1717 = vmatpush.bf16.msra.mxu0 %v1542
    %1718 = vmatpush.bf16.msra.mxu0 %v1539
    %1719 = vmatpush.bf16.msra.mxu0 %v1536
    %1720 = vmatpush.bf16.msra.mxu0 %v1533
    %1721 = vmatpush.bf16.msra.mxu0 %v1530
    %1722 = vmatpush.bf16.msra.mxu0 %v1527
    %1723 = vmatpush.bf16.msra.mxu0 %v1524
    %1724 = vmatmul.bf16.gmra.mxu0 %v596
    %v1725 = vpop.f32.mrf.mxu0
    %v1726 = vadd.f32 0.0, %v1725
    %v1727 = vpop.f32.mrf.mxu0
    %1728 = vdwg.mxu0
    %1729 = vmatpush.bf16.msra.mxu0 %v1569
    %1730 = vmatpush.bf16.msra.mxu0 %v1566
    %1731 = vmatpush.bf16.msra.mxu0 %v1563
    %1732 = vmatpush.bf16.msra.mxu0 %v1560
    %1733 = vmatpush.bf16.msra.mxu0 %v1557
    %1734 = vmatpush.bf16.msra.mxu0 %v1554
    %1735 = vmatpush.bf16.msra.mxu0 %v1551
    %1736 = vmatpush.bf16.msra.mxu0 %v1548
    %1737 = vmatmul.bf16.gmra.mxu0 %v597
    %v1738 = vpop.f32.mrf.mxu0
    %v1739 = vadd.f32 %v1726, %v1738
    %v1740 = vpop.f32.mrf.mxu0
    %1741 = vdwg.mxu0
    %1742 = vmatpush.bf16.msra.mxu0 %v1593
    %1743 = vmatpush.bf16.msra.mxu0 %v1590
    %1744 = vmatpush.bf16.msra.mxu0 %v1587
    %1745 = vmatpush.bf16.msra.mxu0 %v1584
    %1746 = vmatpush.bf16.msra.mxu0 %v1581
    %1747 = vmatpush.bf16.msra.mxu0 %v1578
    %1748 = vmatpush.bf16.msra.mxu0 %v1575
    %1749 = vmatpush.bf16.msra.mxu0 %v1572
    %1750 = vmatmul.bf16.gmra.mxu0 %v598
    %v1751 = vpop.f32.mrf.mxu0
    %v1752 = vadd.f32 %v1739, %v1751
    %v1753 = vpop.f32.mrf.mxu0
    %1754 = vdwg.mxu0
    %1755 = vmatpush.bf16.msra.mxu0 %v1617
    %1756 = vmatpush.bf16.msra.mxu0 %v1614
    %1757 = vmatpush.bf16.msra.mxu0 %v1611
    %1758 = vmatpush.bf16.msra.mxu0 %v1608
    %1759 = vmatpush.bf16.msra.mxu0 %v1605
    %1760 = vmatpush.bf16.msra.mxu0 %v1602
    %1761 = vmatpush.bf16.msra.mxu0 %v1599
    %1762 = vmatpush.bf16.msra.mxu0 %v1596
    %1763 = vmatmul.bf16.gmra.mxu0 %v599
    %v1764 = vpop.f32.mrf.mxu0
    %v1765 = vadd.f32 %v1752, %v1764
    %v1766 = vpop.f32.mrf.mxu0
    %1767 = vdwg.mxu0
    %1768 = vmatpush.bf16.msra.mxu0 %v1546
    %1769 = vmatpush.bf16.msra.mxu0 %v1543
    %1770 = vmatpush.bf16.msra.mxu0 %v1540
    %1771 = vmatpush.bf16.msra.mxu0 %v1537
    %1772 = vmatpush.bf16.msra.mxu0 %v1534
    %1773 = vmatpush.bf16.msra.mxu0 %v1531
    %1774 = vmatpush.bf16.msra.mxu0 %v1528
    %1775 = vmatpush.bf16.msra.mxu0 %v1525
    %1776 = vmatmul.bf16.gmra.mxu0 %v596
    %v1777 = vpop.f32.mrf.mxu0
    %v1778 = vadd.f32 0.0, %v1777
    %v1779 = vpop.f32.mrf.mxu0
    %1780 = vdwg.mxu0
    %1781 = vmatpush.bf16.msra.mxu0 %v1570
    %1782 = vmatpush.bf16.msra.mxu0 %v1567
    %1783 = vmatpush.bf16.msra.mxu0 %v1564
    %1784 = vmatpush.bf16.msra.mxu0 %v1561
    %1785 = vmatpush.bf16.msra.mxu0 %v1558
    %1786 = vmatpush.bf16.msra.mxu0 %v1555
    %1787 = vmatpush.bf16.msra.mxu0 %v1552
    %1788 = vmatpush.bf16.msra.mxu0 %v1549
    %1789 = vmatmul.bf16.gmra.mxu0 %v597
    %v1790 = vpop.f32.mrf.mxu0
    %v1791 = vadd.f32 %v1778, %v1790
    %v1792 = vpop.f32.mrf.mxu0
    %1793 = vdwg.mxu0
    %1794 = vmatpush.bf16.msra.mxu0 %v1594
    %1795 = vmatpush.bf16.msra.mxu0 %v1591
    %1796 = vmatpush.bf16.msra.mxu0 %v1588
    %1797 = vmatpush.bf16.msra.mxu0 %v1585
    %1798 = vmatpush.bf16.msra.mxu0 %v1582
    %1799 = vmatpush.bf16.msra.mxu0 %v1579
    %1800 = vmatpush.bf16.msra.mxu0 %v1576
    %1801 = vmatpush.bf16.msra.mxu0 %v1573
    %1802 = vmatmul.bf16.gmra.mxu0 %v598
    %v1803 = vpop.f32.mrf.mxu0
    %v1804 = vadd.f32 %v1791, %v1803
    %v1805 = vpop.f32.mrf.mxu0
    %1806 = vdwg.mxu0
    %1807 = vmatpush.bf16.msra.mxu0 %v1618
    %1808 = vmatpush.bf16.msra.mxu0 %v1615
    %1809 = vmatpush.bf16.msra.mxu0 %v1612
    %1810 = vmatpush.bf16.msra.mxu0 %v1609
    %1811 = vmatpush.bf16.msra.mxu0 %v1606
    %1812 = vmatpush.bf16.msra.mxu0 %v1603
    %1813 = vmatpush.bf16.msra.mxu0 %v1600
    %1814 = vmatpush.bf16.msra.mxu0 %v1597
    %1815 = vmatmul.bf16.gmra.mxu0 %v599
    %v1816 = vpop.f32.mrf.mxu0
    %v1817 = vadd.f32 %v1804, %v1816
    %v1818 = vpop.f32.mrf.mxu0
    %1819 = vdwg.mxu0
    %1820 = vmatpush.bf16.msra.mxu0 %v1547
    %1821 = vmatpush.bf16.msra.mxu0 %v1544
    %1822 = vmatpush.bf16.msra.mxu0 %v1541
    %1823 = vmatpush.bf16.msra.mxu0 %v1538
    %1824 = vmatpush.bf16.msra.mxu0 %v1535
    %1825 = vmatpush.bf16.msra.mxu0 %v1532
    %1826 = vmatpush.bf16.msra.mxu0 %v1529
    %1827 = vmatpush.bf16.msra.mxu0 %v1526
    %1828 = vmatmul.bf16.gmra.mxu0 %v596
    %v1829 = vpop.f32.mrf.mxu0
    %v1830 = vadd.f32 0.0, %v1829
    %v1831 = vpop.f32.mrf.mxu0
    %1832 = vdwg.mxu0
    %1833 = vmatpush.bf16.msra.mxu0 %v1571
    %1834 = vmatpush.bf16.msra.mxu0 %v1568
    %1835 = vmatpush.bf16.msra.mxu0 %v1565
    %1836 = vmatpush.bf16.msra.mxu0 %v1562
    %1837 = vmatpush.bf16.msra.mxu0 %v1559
    %1838 = vmatpush.bf16.msra.mxu0 %v1556
    %1839 = vmatpush.bf16.msra.mxu0 %v1553
    %1840 = vmatpush.bf16.msra.mxu0 %v1550
    %1841 = vmatmul.bf16.gmra.mxu0 %v597
    %v1842 = vpop.f32.mrf.mxu0
    %v1843 = vadd.f32 %v1830, %v1842
    %v1844 = vpop.f32.mrf.mxu0
    %1845 = vdwg.mxu0
    %1846 = vmatpush.bf16.msra.mxu0 %v1595
    %1847 = vmatpush.bf16.msra.mxu0 %v1592
    %1848 = vmatpush.bf16.msra.mxu0 %v1589
    %1849 = vmatpush.bf16.msra.mxu0 %v1586
    %1850 = vmatpush.bf16.msra.mxu0 %v1583
    %1851 = vmatpush.bf16.msra.mxu0 %v1580
    %1852 = vmatpush.bf16.msra.mxu0 %v1577
    %1853 = vmatpush.bf16.msra.mxu0 %v1574
    %1854 = vmatmul.bf16.gmra.mxu0 %v598
    %v1855 = vpop.f32.mrf.mxu0
    %v1856 = vadd.f32 %v1843, %v1855
    %v1857 = vpop.f32.mrf.mxu0
    %1858 = vdwg.mxu0
    %1859 = vmatpush.bf16.msra.mxu0 %v1619
    %1860 = vmatpush.bf16.msra.mxu0 %v1616
    %1861 = vmatpush.bf16.msra.mxu0 %v1613
    %1862 = vmatpush.bf16.msra.mxu0 %v1610
    %1863 = vmatpush.bf16.msra.mxu0 %v1607
    %1864 = vmatpush.bf16.msra.mxu0 %v1604
    %1865 = vmatpush.bf16.msra.mxu0 %v1601
    %1866 = vmatpush.bf16.msra.mxu0 %v1598
    %1867 = vmatmul.bf16.gmra.mxu0 %v599
    %v1868 = vpop.f32.mrf.mxu0
    %v1869 = vadd.f32 %v1856, %v1868
    %v1870 = vpop.f32.mrf.mxu0
    %1871 = vdwg.mxu0
    %v1872 = vld [vmem:[%s6] sm:$0x3f]
    %v1874 = vperm.slane %v1872, 0
    %v1875 = vperm.slane %v1872, 1
    %v1876 = vperm.slane %v1872, 2
    %v1877 = vperm.slane %v1872, 3
    %v1878 = vperm.slane %v1872, 4
    %v1879 = vperm.slane %v1872, 5
    %v1886 = vadd.f32 %v1161, %v1874
    %v1887 = vadd.f32 %v1213, %v1875
    %v1888 = vadd.f32 %v1265, %v1876
    %v1889 = vadd.f32 %v1765, %v1877
    %v1890 = vadd.f32 %v1817, %v1878
    %v1891 = vadd.f32 %v1869, %v1879
    %v1892 = vmax.f32 %v1886, 0.0
    %v1893 = vmax.f32 %v1887, 0.0
    %v1894 = vmax.f32 %v1888, 0.0
    %v1895 = vmax.f32 %v1889, 0.0
    %v1896 = vmax.f32 %v1890, 0.0
    %v1897 = vmax.f32 %v1891, 0.0
    %v1898 = vpack.c.bf16 %v1892, %v1892
    %v1899 = vpack.c.bf16 %v1893, %v1893
    %v1900 = vpack.c.bf16 %v1894, %v1894
    %v1901 = vpack.c.bf16 %v1895, %v1895
    %v1902 = vpack.c.bf16 %v1896, %v1896
    %v1903 = vpack.c.bf16 %v1897, %v1897
    %v1904 = vld [vmem:[%s7] sm:$0xf]
    %v1905 = vld [vmem:[%s7 + $0x4] sm:$0xf]
    %v1906 = vld [vmem:[%s7 + $0x8] sm:$0xf]
    %v1907 = vld [vmem:[%s7 + $0xc] sm:$0xf]
    %v1908 = vld [vmem:[%s7 + $0x10] sm:$0xf]
    %v1909 = vld [vmem:[%s7 + $0x14] sm:$0xf]
    %v1910 = vld [vmem:[%s7 + $0x18] sm:$0xf]
    %v1911 = vld [vmem:[%s7 + $0x1c] sm:$0xf]
    %v1912 = vld [vmem:[%s7 + $0x20] sm:$0xf]
    %v1913 = vld [vmem:[%s7 + $0x24] sm:$0xf]
    %v1914 = vld [vmem:[%s7 + $0x28] sm:$0xf]
    %v1915 = vld [vmem:[%s7 + $0x2c] sm:$0xf]
    %v1916 = vld [vmem:[%s7 + $0x30] sm:$0xf]
    %v1917 = vld [vmem:[%s7 + $0x34] sm:$0xf]
    %v1918 = vld [vmem:[%s7 + $0x38] sm:$0xf]
    %v1919 = vld [vmem:[%s7 + $0x3c] sm:$0xf]
    %v1920 = vld [vmem:[%s7 + $0x40] sm:$0xf]
    %v1921 = vld [vmem:[%s7 + $0x44] sm:$0xf]
    %v1922 = vld [vmem:[%s7 + $0x48] sm:$0xf]
    %v1923 = vld [vmem:[%s7 + $0x4c] sm:$0xf]
    %v1924 = vld [vmem:[%s7 + $0x50] sm:$0xf]
    %v1925 = vld [vmem:[%s7 + $0x54] sm:$0xf]
    %v1926 = vld [vmem:[%s7 + $0x58] sm:$0xf]
    %v1927 = vld [vmem:[%s7 + $0x5c] sm:$0xf]
    %v1928 = vld [vmem:[%s7 + $0x60] sm:$0xf]
    %v1929 = vld [vmem:[%s7 + $0x64] sm:$0xf]
    %v1930 = vld [vmem:[%s7 + $0x68] sm:$0xf]
    %v1931 = vld [vmem:[%s7 + $0x6c] sm:$0xf]
    %v1932 = vld [vmem:[%s7 + $0x70] sm:$0xf]
    %v1933 = vld [vmem:[%s7 + $0x74] sm:$0xf]
    %v1934 = vld [vmem:[%s7 + $0x78] sm:$0xf]
    %v1935 = vld [vmem:[%s7 + $0x7c] sm:$0xf]
    %v1936 = vld [vmem:[%s7 + $0x80] sm:$0xf]
    %v1937 = vld [vmem:[%s7 + $0x84] sm:$0xf]
    %v1938 = vld [vmem:[%s7 + $0x88] sm:$0xf]
    %v1939 = vld [vmem:[%s7 + $0x8c] sm:$0xf]
    %v1940 = vld [vmem:[%s7 + $0x90] sm:$0xf]
    %v1941 = vld [vmem:[%s7 + $0x94] sm:$0xf]
    %v1942 = vld [vmem:[%s7 + $0x98] sm:$0xf]
    %v1943 = vld [vmem:[%s7 + $0x9c] sm:$0xf]
    %v1944 = vld [vmem:[%s7 + $0xa0] sm:$0xf]
    %v1945 = vld [vmem:[%s7 + $0xa4] sm:$0xf]
    %v1946 = vld [vmem:[%s7 + $0xa8] sm:$0xf]
    %v1947 = vld [vmem:[%s7 + $0xac] sm:$0xf]
    %v1948 = vld [vmem:[%s7 + $0xb0] sm:$0xf]
    %v1949 = vld [vmem:[%s7 + $0xb4] sm:$0xf]
    %v1950 = vld [vmem:[%s7 + $0xb8] sm:$0xf]
    %v1951 = vld [vmem:[%s7 + $0xbc] sm:$0xf]
    %v1952 = vld [vmem:[%s7 + $0xc0] sm:$0xf]
    %v1953 = vld [vmem:[%s7 + $0xc4] sm:$0xf]
    %v1954 = vld [vmem:[%s7 + $0xc8] sm:$0xf]
    %v1955 = vld [vmem:[%s7 + $0xcc] sm:$0xf]
    %v1956 = vld [vmem:[%s7 + $0xd0] sm:$0xf]
    %v1957 = vld [vmem:[%s7 + $0xd4] sm:$0xf]
    %v1958 = vld [vmem:[%s7 + $0xd8] sm:$0xf]
    %v1959 = vld [vmem:[%s7 + $0xdc] sm:$0xf]
    %v1960 = vld [vmem:[%s7 + $0xe0] sm:$0xf]
    %v1961 = vld [vmem:[%s7 + $0xe4] sm:$0xf]
    %v1962 = vld [vmem:[%s7 + $0xe8] sm:$0xf]
    %v1963 = vld [vmem:[%s7 + $0xec] sm:$0xf]
    %v1964 = vld [vmem:[%s7 + $0xf0] sm:$0xf]
    %v1965 = vld [vmem:[%s7 + $0xf4] sm:$0xf]
    %v1966 = vld [vmem:[%s7 + $0xf8] sm:$0xf]
    %v1967 = vld [vmem:[%s7 + $0xfc] sm:$0xf]
    %v1968 = vld [vmem:[%s7 + $0x100] sm:$0xf]
    %v1969 = vld [vmem:[%s7 + $0x104] sm:$0xf]
    %v1970 = vld [vmem:[%s7 + $0x108] sm:$0xf]
    %v1971 = vld [vmem:[%s7 + $0x10c] sm:$0xf]
    %v1972 = vld [vmem:[%s7 + $0x110] sm:$0xf]
    %v1973 = vld [vmem:[%s7 + $0x114] sm:$0xf]
    %v1974 = vld [vmem:[%s7 + $0x118] sm:$0xf]
    %v1975 = vld [vmem:[%s7 + $0x11c] sm:$0xf]
    %v1976 = vld [vmem:[%s7 + $0x120] sm:$0xf]
    %v1977 = vld [vmem:[%s7 + $0x124] sm:$0xf]
    %v1978 = vld [vmem:[%s7 + $0x128] sm:$0xf]
    %v1979 = vld [vmem:[%s7 + $0x12c] sm:$0xf]
    %v1980 = vld [vmem:[%s7 + $0x130] sm:$0xf]
    %v1981 = vld [vmem:[%s7 + $0x134] sm:$0xf]
    %v1982 = vld [vmem:[%s7 + $0x138] sm:$0xf]
    %v1983 = vld [vmem:[%s7 + $0x13c] sm:$0xf]
    %v1984 = vld [vmem:[%s7 + $0x140] sm:$0xf]
    %v1985 = vld [vmem:[%s7 + $0x144] sm:$0xf]
    %v1986 = vld [vmem:[%s7 + $0x148] sm:$0xf]
    %v1987 = vld [vmem:[%s7 + $0x14c] sm:$0xf]
    %v1988 = vld [vmem:[%s7 + $0x150] sm:$0xf]
    %v1989 = vld [vmem:[%s7 + $0x154] sm:$0xf]
    %v1990 = vld [vmem:[%s7 + $0x158] sm:$0xf]
    %v1991 = vld [vmem:[%s7 + $0x15c] sm:$0xf]
    %v1992 = vld [vmem:[%s7 + $0x160] sm:$0xf]
    %v1993 = vld [vmem:[%s7 + $0x164] sm:$0xf]
    %v1994 = vld [vmem:[%s7 + $0x168] sm:$0xf]
    %v1995 = vld [vmem:[%s7 + $0x16c] sm:$0xf]
    %v1996 = vld [vmem:[%s7 + $0x170] sm:$0xf]
    %v1997 = vld [vmem:[%s7 + $0x174] sm:$0xf]
    %v1998 = vld [vmem:[%s7 + $0x178] sm:$0xf]
    %v1999 = vld [vmem:[%s7 + $0x17c] sm:$0xf]
    %v2000 = vld [vmem:[%s8] sm:$0x1]
    %v2002 = vperm.slane %v2000, 0
    %v2100 = vunpack.c.l.b16 %v1904
    %v2101 = vunpack.c.l.b16 %v1905
    %v2102 = vunpack.c.l.b16 %v1906
    %v2103 = vunpack.c.l.b16 %v1907
    %v2104 = vunpack.c.l.b16 %v1908
    %v2105 = vunpack.c.l.b16 %v1909
    %v2106 = vunpack.c.l.b16 %v1910
    %v2107 = vunpack.c.l.b16 %v1911
    %v2108 = vunpack.c.l.b16 %v1912
    %v2109 = vunpack.c.l.b16 %v1913
    %v2110 = vunpack.c.l.b16 %v1914
    %v2111 = vunpack.c.l.b16 %v1915
    %v2112 = vunpack.c.l.b16 %v1916
    %v2113 = vunpack.c.l.b16 %v1917
    %v2114 = vunpack.c.l.b16 %v1918
    %v2115 = vunpack.c.l.b16 %v1919
    %v2116 = vunpack.c.l.b16 %v1920
    %v2117 = vunpack.c.l.b16 %v1921
    %v2118 = vunpack.c.l.b16 %v1922
    %v2119 = vunpack.c.l.b16 %v1923
    %v2120 = vunpack.c.l.b16 %v1924
    %v2121 = vunpack.c.l.b16 %v1925
    %v2122 = vunpack.c.l.b16 %v1926
    %v2123 = vunpack.c.l.b16 %v1927
    %v2124 = vunpack.c.l.b16 %v1928
    %v2125 = vunpack.c.l.b16 %v1929
    %v2126 = vunpack.c.l.b16 %v1930
    %v2127 = vunpack.c.l.b16 %v1931
    %v2128 = vunpack.c.l.b16 %v1932
    %v2129 = vunpack.c.l.b16 %v1933
    %v2130 = vunpack.c.l.b16 %v1934
    %v2131 = vunpack.c.l.b16 %v1935
    %v2132 = vunpack.c.l.b16 %v1936
    %v2133 = vunpack.c.l.b16 %v1937
    %v2134 = vunpack.c.l.b16 %v1938
    %v2135 = vunpack.c.l.b16 %v1939
    %v2136 = vunpack.c.l.b16 %v1940
    %v2137 = vunpack.c.l.b16 %v1941
    %v2138 = vunpack.c.l.b16 %v1942
    %v2139 = vunpack.c.l.b16 %v1943
    %v2140 = vunpack.c.l.b16 %v1944
    %v2141 = vunpack.c.l.b16 %v1945
    %v2142 = vunpack.c.l.b16 %v1946
    %v2143 = vunpack.c.l.b16 %v1947
    %v2144 = vunpack.c.l.b16 %v1948
    %v2145 = vunpack.c.l.b16 %v1949
    %v2146 = vunpack.c.l.b16 %v1950
    %v2147 = vunpack.c.l.b16 %v1951
    %v2148 = vunpack.c.l.b16 %v1952
    %v2149 = vunpack.c.l.b16 %v1953
    %v2150 = vunpack.c.l.b16 %v1954
    %v2151 = vunpack.c.l.b16 %v1955
    %v2152 = vunpack.c.l.b16 %v1956
    %v2153 = vunpack.c.l.b16 %v1957
    %v2154 = vunpack.c.l.b16 %v1958
    %v2155 = vunpack.c.l.b16 %v1959
    %v2156 = vunpack.c.l.b16 %v1960
    %v2157 = vunpack.c.l.b16 %v1961
    %v2158 = vunpack.c.l.b16 %v1962
    %v2159 = vunpack.c.l.b16 %v1963
    %v2160 = vunpack.c.l.b16 %v1964
    %v2161 = vunpack.c.l.b16 %v1965
    %v2162 = vunpack.c.l.b16 %v1966
    %v2163 = vunpack.c.l.b16 %v1967
    %v2164 = vunpack.c.l.b16 %v1968
    %v2165 = vunpack.c.l.b16 %v1969
    %v2166 = vunpack.c.l.b16 %v1970
    %v2167 = vunpack.c.l.b16 %v1971
    %v2168 = vunpack.c.l.b16 %v1972
    %v2169 = vunpack.c.l.b16 %v1973
    %v2170 = vunpack.c.l.b16 %v1974
    %v2171 = vunpack.c.l.b16 %v1975
    %v2172 = vunpack.c.l.b16 %v1976
    %v2173 = vunpack.c.l.b16 %v1977
    %v2174 = vunpack.c.l.b16 %v1978
    %v2175 = vunpack.c.l.b16 %v1979
    %v2176 = vunpack.c.l.b16 %v1980
    %v2177 = vunpack.c.l.b16 %v1981
    %v2178 = vunpack.c.l.b16 %v1982
    %v2179 = vunpack.c.l.b16 %v1983
    %v2180 = vunpack.c.l.b16 %v1984
    %v2181 = vunpack.c.l.b16 %v1985
    %v2182 = vunpack.c.l.b16 %v1986
    %v2183 = vunpack.c.l.b16 %v1987
    %v2184 = vunpack.c.l.b16 %v1988
    %v2185 = vunpack.c.l.b16 %v1989
    %v2186 = vunpack.c.l.b16 %v1990
    %v2187 = vunpack.c.l.b16 %v1991
    %v2188 = vunpack.c.l.b16 %v1992
    %v2189 = vunpack.c.l.b16 %v1993
    %v2190 = vunpack.c.l.b16 %v1994
    %v2191 = vunpack.c.l.b16 %v1995
    %v2192 = vunpack.c.l.b16 %v1996
    %v2193 = vunpack.c.l.b16 %v1997
    %v2194 = vunpack.c.l.b16 %v1998
    %v2195 = vunpack.c.l.b16 %v1999
    %v2196 = vpack.c.b16 %v2101, %v2100
    %v2197 = vpack.c.b16 %v2103, %v2102
    %v2198 = vpack.c.b16 %v2105, %v2104
    %v2199 = vpack.c.b16 %v2107, %v2106
    %v2200 = vpack.c.b16 %v2109, %v2108
    %v2201 = vpack.c.b16 %v2111, %v2110
    %v2202 = vpack.c.b16 %v2113, %v2112
    %v2203 = vpack.c.b16 %v2115, %v2114
    %v2204 = vpack.c.b16 %v2117, %v2116
    %v2205 = vpack.c.b16 %v2119, %v2118
    %v2206 = vpack.c.b16 %v2121, %v2120
    %v2207 = vpack.c.b16 %v2123, %v2122
    %v2208 = vpack.c.b16 %v2125, %v2124
    %v2209 = vpack.c.b16 %v2127, %v2126
    %v2210 = vpack.c.b16 %v2129, %v2128
    %v2211 = vpack.c.b16 %v2131, %v2130
    %v2212 = vpack.c.b16 %v2133, %v2132
    %v2213 = vpack.c.b16 %v2135, %v2134
    %v2214 = vpack.c.b16 %v2137, %v2136
    %v2215 = vpack.c.b16 %v2139, %v2138
    %v2216 = vpack.c.b16 %v2141, %v2140
    %v2217 = vpack.c.b16 %v2143, %v2142
    %v2218 = vpack.c.b16 %v2145, %v2144
    %v2219 = vpack.c.b16 %v2147, %v2146
    %v2220 = vpack.c.b16 %v2149, %v2148
    %v2221 = vpack.c.b16 %v2151, %v2150
    %v2222 = vpack.c.b16 %v2153, %v2152
    %v2223 = vpack.c.b16 %v2155, %v2154
    %v2224 = vpack.c.b16 %v2157, %v2156
    %v2225 = vpack.c.b16 %v2159, %v2158
    %v2226 = vpack.c.b16 %v2161, %v2160
    %v2227 = vpack.c.b16 %v2163, %v2162
    %v2228 = vpack.c.b16 %v2165, %v2164
    %v2229 = vpack.c.b16 %v2167, %v2166
    %v2230 = vpack.c.b16 %v2169, %v2168
    %v2231 = vpack.c.b16 %v2171, %v2170
    %v2232 = vpack.c.b16 %v2173, %v2172
    %v2233 = vpack.c.b16 %v2175, %v2174
    %v2234 = vpack.c.b16 %v2177, %v2176
    %v2235 = vpack.c.b16 %v2179, %v2178
    %v2236 = vpack.c.b16 %v2181, %v2180
    %v2237 = vpack.c.b16 %v2183, %v2182
    %v2238 = vpack.c.b16 %v2185, %v2184
    %v2239 = vpack.c.b16 %v2187, %v2186
    %v2240 = vpack.c.b16 %v2189, %v2188
    %v2241 = vpack.c.b16 %v2191, %v2190
    %v2242 = vpack.c.b16 %v2193, %v2192
    %v2243 = vpack.c.b16 %v2195, %v2194
    %2292 = vmatpush.bf16.msra.mxu0 %v2203
    %2293 = vmatpush.bf16.msra.mxu0 %v2202
    %2294 = vmatpush.bf16.msra.mxu0 %v2201
    %2295 = vmatpush.bf16.msra.mxu0 %v2200
    %2296 = vmatpush.bf16.msra.mxu0 %v2199
    %2297 = vmatpush.bf16.msra.mxu0 %v2198
    %2298 = vmatpush.bf16.msra.mxu0 %v2197
    %2299 = vmatpush.bf16.msra.mxu0 %v2196
    %2300 = vmatmul.bf16.gmra.mxu0 %v1898
    %v2301 = vpop.f32.mrf.mxu0
    %v2302 = vadd.f32 %v2002, %v2301
    %v2303 = vpop.f32.mrf.mxu0
    %2304 = vdwg.mxu0
    %2305 = vmatpush.bf16.msra.mxu0 %v2211
    %2306 = vmatpush.bf16.msra.mxu0 %v2210
    %2307 = vmatpush.bf16.msra.mxu0 %v2209
    %2308 = vmatpush.bf16.msra.mxu0 %v2208
    %2309 = vmatpush.bf16.msra.mxu0 %v2207
    %2310 = vmatpush.bf16.msra.mxu0 %v2206
    %2311 = vmatpush.bf16.msra.mxu0 %v2205
    %2312 = vmatpush.bf16.msra.mxu0 %v2204
    %2313 = vmatmul.bf16.gmra.mxu0 %v1899
    %v2314 = vpop.f32.mrf.mxu0
    %v2315 = vadd.f32 %v2302, %v2314
    %v2316 = vpop.f32.mrf.mxu0
    %2317 = vdwg.mxu0
    %2318 = vmatpush.bf16.msra.mxu0 %v2219
    %2319 = vmatpush.bf16.msra.mxu0 %v2218
    %2320 = vmatpush.bf16.msra.mxu0 %v2217
    %2321 = vmatpush.bf16.msra.mxu0 %v2216
    %2322 = vmatpush.bf16.msra.mxu0 %v2215
    %2323 = vmatpush.bf16.msra.mxu0 %v2214
    %2324 = vmatpush.bf16.msra.mxu0 %v2213
    %2325 = vmatpush.bf16.msra.mxu0 %v2212
    %2326 = vmatmul.bf16.gmra.mxu0 %v1900
    %v2327 = vpop.f32.mrf.mxu0
    %v2328 = vadd.f32 %v2315, %v2327
    %v2329 = vpop.f32.mrf.mxu0
    %2330 = vdwg.mxu0
    %2331 = vmatpush.bf16.msra.mxu0 %v2227
    %2332 = vmatpush.bf16.msra.mxu0 %v2226
    %2333 = vmatpush.bf16.msra.mxu0 %v2225
    %2334 = vmatpush.bf16.msra.mxu0 %v2224
    %2335 = vmatpush.bf16.msra.mxu0 %v2223
    %2336 = vmatpush.bf16.msra.mxu0 %v2222
    %2337 = vmatpush.bf16.msra.mxu0 %v2221
    %2338 = vmatpush.bf16.msra.mxu0 %v2220
    %2339 = vmatmul.bf16.gmra.mxu0 %v1901
    %v2340 = vpop.f32.mrf.mxu0
    %v2341 = vadd.f32 %v2328, %v2340
    %v2342 = vpop.f32.mrf.mxu0
    %2343 = vdwg.mxu0
    %2344 = vmatpush.bf16.msra.mxu0 %v2235
    %2345 = vmatpush.bf16.msra.mxu0 %v2234
    %2346 = vmatpush.bf16.msra.mxu0 %v2233
    %2347 = vmatpush.bf16.msra.mxu0 %v2232
    %2348 = vmatpush.bf16.msra.mxu0 %v2231
    %2349 = vmatpush.bf16.msra.mxu0 %v2230
    %2350 = vmatpush.bf16.msra.mxu0 %v2229
    %2351 = vmatpush.bf16.msra.mxu0 %v2228
    %2352 = vmatmul.bf16.gmra.mxu0 %v1902
    %v2353 = vpop.f32.mrf.mxu0
    %v2354 = vadd.f32 %v2341, %v2353
    %v2355 = vpop.f32.mrf.mxu0
    %2356 = vdwg.mxu0
    %2357 = vmatpush.bf16.msra.mxu0 %v2243
    %2358 = vmatpush.bf16.msra.mxu0 %v2242
    %2359 = vmatpush.bf16.msra.mxu0 %v2241
    %2360 = vmatpush.bf16.msra.mxu0 %v2240
    %2361 = vmatpush.bf16.msra.mxu0 %v2239
    %2362 = vmatpush.bf16.msra.mxu0 %v2238
    %2363 = vmatpush.bf16.msra.mxu0 %v2237
    %2364 = vmatpush.bf16.msra.mxu0 %v2236
    %2365 = vmatmul.bf16.gmra.mxu0 %v1903
    %v2366 = vpop.f32.mrf.mxu0
    %v2367 = vadd.f32 %v2354, %v2366
    %v2368 = vpop.f32.mrf.mxu0
    %2369 = vdwg.mxu0
    %vm2370 = vcmask 15360
    %2371 = vst.msk [vmem:[%s9] sm:$0xff] %vm2370, %v2367
    // Predicated region
    $region42: #{critic_forward.1} parent=1 // pred_check
      _
    $region43: #{critic_forward.1} parent=1 // pred_check_branch
      %2373 = sbr.rel (0) target = $region45
    $region44: #{critic_forward.1} parent=1 // pred_region
      _
    $region45: #{critic_forward.1} parent=1 // pred_fallthru
      _
    // Predicated region
    $region46: #{critic_forward.1} parent=1 // pred_check
      _
    $region47: #{critic_forward.1} parent=1 // pred_check_branch
      %2375 = sbr.rel (0) target = $region49
    $region48: #{critic_forward.1} parent=1 // pred_region
      _
    $region49: #{critic_forward.1} parent=1 // pred_fallthru
      _
    %2376 = vsyncpa [#allocation3], 1

</llo_original>
